<compile_context>
chip_gen: v7x
topology: tpu7x:2x2x1
jax: 0.10.0
libtpu: 0.0.40
codegen_flags: <defaults>
</compile_context>

<pallas_src>
import math
import functools

import jax
import jax.numpy as jnp
from jax import lax
from jax.experimental import pallas as pl
from jax.experimental.pallas import tpu as pltpu


# ----------------------------- kernel-side math -----------------------------

def _layer_norm(x, g, b, eps=1e-5):
    mu = jnp.mean(x, axis=-1, keepdims=True)
    var = jnp.mean(jnp.square(x - mu), axis=-1, keepdims=True)
    return (x - mu) * lax.rsqrt(var + eps) * g + b


def _encoder_kernel(x_ref, pos_ref,
                    ln0_g_ref, ln0_b_ref,
                    wq_ref, wk_ref, wv_ref, bq_ref, bk_ref, bv_ref,
                    wo_ref, bo_ref,
                    ln1_g_ref, ln1_b_ref, w1_ref, b1_ref, w2_ref, b2_ref,
                    lnf_g_ref, lnf_b_ref,
                    out_ref,
                    *, seq, embed_dim, num_heads):
    """grid = (batch, layer): one batch element, one pre-norm encoder layer."""
    l = pl.program_id(1)
    num_layers = pl.num_programs(1)
    head_dim = embed_dim // num_heads

    # ---- init activation carry (resident output block) at the first layer ----
    @pl.when(l == 0)
    def _init():
        out_ref[...] = math.sqrt(embed_dim) * x_ref[...] + pos_ref[...]

    x = out_ref[...]                                            # (S, E) f32 carry

    # -------- self-attention block (pre-norm) --------
    h = _layer_norm(x, ln0_g_ref[0], ln0_b_ref[0])              # (S, E) f32
    hb = h.astype(jnp.bfloat16)
    # one flat matmul per projection (q-scaling folded into wq/bq); bf16 in, f32 acc
    q = jnp.dot(hb, wq_ref[0], preferred_element_type=jnp.float32) + bq_ref[0]
    k = jnp.dot(hb, wk_ref[0], preferred_element_type=jnp.float32) + bk_ref[0]
    v = jnp.dot(hb, wv_ref[0], preferred_element_type=jnp.float32) + bv_ref[0]

    attn = jnp.zeros((seq, embed_dim), jnp.float32)
    for hh in range(num_heads):                                 # tiny static loop (H=4)
        lo, hi = hh * head_dim, (hh + 1) * head_dim
        qh = q[:, lo:hi]                                        # (S, hd)
        kh = k[:, lo:hi]
        vh = v[:, lo:hi]
        s = lax.dot_general(qh, kh, (((1,), (1,)), ((), ())),   # q @ k^T  (S, S)
                            preferred_element_type=jnp.float32)
        s = s - jnp.max(s, axis=-1, keepdims=True)
        p = jnp.exp(s)
        p = p * pl.reciprocal(jnp.sum(p, axis=-1, keepdims=True), approx=True)
        o_h = jnp.dot(p, vh, preferred_element_type=jnp.float32)        # (S, hd)
        attn = attn + jnp.dot(o_h.astype(jnp.bfloat16), wo_ref[0, hh],
                              preferred_element_type=jnp.float32)       # (S, E)
    attn = attn + bo_ref[0]
    x = x + attn

    # -------- feed-forward block (pre-norm) --------
    hf = _layer_norm(x, ln1_g_ref[0], ln1_b_ref[0])
    hf = jnp.dot(hf.astype(jnp.bfloat16), w1_ref[0],
                 preferred_element_type=jnp.float32) + b1_ref[0]
    hf = jax.nn.gelu(hf, approximate=True)          # tanh GELU (EUP); ~= F.gelu(erf)
    hf = jnp.dot(hf.astype(jnp.bfloat16), w2_ref[0],
                 preferred_element_type=jnp.float32) + b2_ref[0]
    x = x + hf

    out_ref[...] = x                                            # carry to next layer

    # ---- final LayerNorm in place at the last layer ----
    @pl.when(l == num_layers - 1)
    def _final():
        out_ref[...] = _layer_norm(x, lnf_g_ref[...], lnf_b_ref[...])


# ------------------------------- JAX glue ------------------------------------

def sinusoidal_pos_emb(seq_len, embed_dim, padding_idx=0):
    """fairseq-style sinusoidal positional embedding for positions 1..seq."""
    half_dim = embed_dim // 2
    emb = math.log(10000.0) / (half_dim - 1)
    emb = jnp.exp(jnp.arange(half_dim, dtype=jnp.float32) * -emb)
    pos = jnp.arange(seq_len, dtype=jnp.float32) + padding_idx + 1
    emb = pos[:, None] * emb[None, :]
    emb = jnp.concatenate([jnp.sin(emb), jnp.cos(emb)], axis=1)
    if embed_dim % 2 == 1:
        emb = jnp.concatenate([emb, jnp.zeros((seq_len, 1), jnp.float32)], axis=1)
    return emb.astype(jnp.float32)                 # (seq, E)


def xavier_uniform(key, shape, fan_in, fan_out):
    bound = math.sqrt(6.0 / (fan_in + fan_out))
    return jax.random.uniform(key, shape, jnp.float32, -bound, bound)


def init_params(key, embed_dim, num_layers):
    """PyTorch-equivalent parameters (weights stored (in, out) for right-multiply)."""
    E, F = embed_dim, 4 * embed_dim
    ks = jax.random.split(key, 4 * num_layers)
    wqkv = jnp.stack([xavier_uniform(ks[4 * l + 0], (E, 3 * E), E, 3 * E) for l in range(num_layers)])
    wo = jnp.stack([xavier_uniform(ks[4 * l + 1], (E, E), E, E) for l in range(num_layers)])
    w1 = jnp.stack([xavier_uniform(ks[4 * l + 2], (E, F), E, F) for l in range(num_layers)])
    w2 = jnp.stack([xavier_uniform(ks[4 * l + 3], (F, E), F, E) for l in range(num_layers)])
    return dict(
        ln0_g=jnp.ones((num_layers, E), jnp.float32), ln0_b=jnp.zeros((num_layers, E), jnp.float32),
        wqkv=wqkv, bqkv=jnp.zeros((num_layers, 3 * E), jnp.float32),
        wo=wo, bo=jnp.zeros((num_layers, E), jnp.float32),
        ln1_g=jnp.ones((num_layers, E), jnp.float32), ln1_b=jnp.zeros((num_layers, E), jnp.float32),
        w1=w1, b1=jnp.zeros((num_layers, F), jnp.float32),
        w2=w2, b2=jnp.zeros((num_layers, E), jnp.float32),
        lnf_g=jnp.ones((E,), jnp.float32), lnf_b=jnp.zeros((E,), jnp.float32),
    )


def prepare_kernel_params(params, *, num_heads):
    """One-time weight re-layout:
       * Wq/Wk/Wv split out of the fused QKV (q-scaling folded into Wq/bq),
       * out-proj stored per head (H, hd, E),
       * big matmul weights cast to bf16 (f32 MXU accumulation in-kernel),
       * biases / LayerNorm params kept f32 as (L, 1, D) row vectors."""
    L, E, _ = params['wqkv'].shape
    hd = E // num_heads
    scaling = hd ** -0.5

    wq = params['wqkv'][:, :, :E] * scaling
    wk = params['wqkv'][:, :, E:2 * E]
    wv = params['wqkv'][:, :, 2 * E:]
    bq = params['bqkv'][:, :E] * scaling
    bk = params['bqkv'][:, E:2 * E]
    bv = params['bqkv'][:, 2 * E:]
    wo = params['wo'].reshape(L, num_heads, hd, E)     # per-head rows of out-proj

    def row_vec(v):                                    # (L, D) -> (L, 1, D)
        return v[:, None, :]

    def w16(w):
        return w.astype(jnp.bfloat16)

    return dict(
        ln0_g=row_vec(params['ln0_g']), ln0_b=row_vec(params['ln0_b']),
        wq=w16(wq), wk=w16(wk), wv=w16(wv),
        bq=row_vec(bq), bk=row_vec(bk), bv=row_vec(bv),
        wo=w16(wo), bo=row_vec(params['bo']),
        ln1_g=row_vec(params['ln1_g']), ln1_b=row_vec(params['ln1_b']),
        w1=w16(params['w1']), b1=row_vec(params['b1']),
        w2=w16(params['w2']), b2=row_vec(params['b2']),
        lnf_g=params['lnf_g'][None, :], lnf_b=params['lnf_b'][None, :],
    )


def cross_modal_transformer_encoder(x_in, kparams, *, num_heads):
    """x_in: (seq_len, batch, embed_dim) float32 -> (seq_len, batch, embed_dim)."""
    seq, batch, E = x_in.shape
    L = kparams['wq'].shape[0]

    # layout plumbing only: (seq, batch, E) -> flat (batch*seq, E)
    x = jnp.transpose(x_in, (1, 0, 2)).reshape(batch * seq, E)
    pos = sinusoidal_pos_emb(seq, E)                   # (seq, E), host-side

    kernel = functools.partial(_encoder_kernel, seq=seq, embed_dim=E,
                               num_heads=num_heads)

    layer_names = ('ln0_g', 'ln0_b', 'wq', 'wk', 'wv', 'bq', 'bk', 'bv',
                   'wo', 'bo', 'ln1_g', 'ln1_b', 'w1', 'b1', 'w2', 'b2')
    layer_ws = [kparams[n] for n in layer_names]
    final_ws = [kparams['lnf_g'], kparams['lnf_b']]

    def layer_spec(a):          # stream one layer's slice per grid step
        nd = a.ndim
        return pl.BlockSpec((1,) + a.shape[1:],
                            lambda b, l, _nd=nd: (l,) + (0,) * (_nd - 1))

    def const_spec(a):          # grid-invariant block
        nd = a.ndim
        return pl.BlockSpec(a.shape, lambda b, l, _nd=nd: (0,) * _nd)

    in_specs = ([pl.BlockSpec((seq, E), lambda b, l: (b, 0)),   # per-batch activation rows
                 const_spec(pos)]
                + [layer_spec(w) for w in layer_ws]
                + [const_spec(w) for w in final_ws])

    out = pl.pallas_call(
        kernel,
        out_shape=jax.ShapeDtypeStruct((batch * seq, E), jnp.float32),
        grid=(batch, L),
        in_specs=in_specs,
        out_specs=pl.BlockSpec((seq, E), lambda b, l: (b, 0)),   # carry along l
        compiler_params=pltpu.CompilerParams(
            dimension_semantics=("parallel", "arbitrary")),
    )(x, pos, *layer_ws, *final_ws)

    return jnp.transpose(out.reshape(batch, seq, E), (1, 0, 2))   # (seq, batch, E)


# --------------------------------- main --------------------------------------

if __name__ == "__main__":
    seq_len, batch, embed_dim = 8, 2, 32
    num_layers, num_heads = 2, 4   # module default num_attn_heads=12 needs E % 12 == 0

    key = jax.random.PRNGKey(0)
    kx, kp = jax.random.split(key)
    x_in = jax.random.normal(kx, (seq_len, batch, embed_dim), dtype=jnp.float32)
    params = init_params(kp, embed_dim, num_layers)
    kparams = prepare_kernel_params(params, num_heads=num_heads)

    out = cross_modal_transformer_encoder(x_in, kparams, num_heads=num_heads)
    out = jax.block_until_ready(out)
    assert out.shape == (seq_len, batch, embed_dim)
    assert bool(jnp.all(jnp.isfinite(out)))
    print("KERNEL_OK")
</pallas_src>

<mosaic_0001>
module attributes {stable_mosaic.version = 11 : i64} {
  func.func @_encoder_kernel(%arg0: i32, %arg1: i32, %arg2: memref<8x32xf32, #tpu.memory_space<vmem>>, %arg3: memref<8x32xf32, #tpu.memory_space<vmem>>, %arg4: memref<1x1x32xf32, #tpu.memory_space<vmem>>, %arg5: memref<1x1x32xf32, #tpu.memory_space<vmem>>, %arg6: memref<1x32x32xbf16, #tpu.memory_space<vmem>>, %arg7: memref<1x32x32xbf16, #tpu.memory_space<vmem>>, %arg8: memref<1x32x32xbf16, #tpu.memory_space<vmem>>, %arg9: memref<1x1x32xf32, #tpu.memory_space<vmem>>, %arg10: memref<1x1x32xf32, #tpu.memory_space<vmem>>, %arg11: memref<1x1x32xf32, #tpu.memory_space<vmem>>, %arg12: memref<1x4x8x32xbf16, #tpu.memory_space<vmem>>, %arg13: memref<1x1x32xf32, #tpu.memory_space<vmem>>, %arg14: memref<1x1x32xf32, #tpu.memory_space<vmem>>, %arg15: memref<1x1x32xf32, #tpu.memory_space<vmem>>, %arg16: memref<1x32x128xbf16, #tpu.memory_space<vmem>>, %arg17: memref<1x1x128xf32, #tpu.memory_space<vmem>>, %arg18: memref<1x128x32xbf16, #tpu.memory_space<vmem>>, %arg19: memref<1x1x32xf32, #tpu.memory_space<vmem>>, %arg20: memref<1x32xf32, #tpu.memory_space<vmem>>, %arg21: memref<1x32xf32, #tpu.memory_space<vmem>>, %arg22: memref<8x32xf32, #tpu.memory_space<vmem>>) attributes {dimension_semantics = [#tpu.dimension_semantics<parallel>, #tpu.dimension_semantics<arbitrary>], iteration_bounds = array<i64: 2, 2>, scalar_prefetch = 0 : i64, scratch_operands = 0 : i64, tpu.core_type = #tpu.core_type<tc>, window_params = [{transform_indices = @transform_0, window_bounds = array<i64: 8, 32>}, {pipeline_mode = #tpu.pipeline_mode<synchronous>, transform_indices = @transform_1, window_bounds = array<i64: 8, 32>}, {transform_indices = @transform_2, window_bounds = array<i64: 1, 1, 32>}, {transform_indices = @transform_3, window_bounds = array<i64: 1, 1, 32>}, {transform_indices = @transform_4, window_bounds = array<i64: 1, 32, 32>}, {transform_indices = @transform_5, window_bounds = array<i64: 1, 32, 32>}, {transform_indices = @transform_6, window_bounds = array<i64: 1, 32, 32>}, {transform_indices = @transform_7, window_bounds = array<i64: 1, 1, 32>}, {transform_indices = @transform_8, window_bounds = array<i64: 1, 1, 32>}, {transform_indices = @transform_9, window_bounds = array<i64: 1, 1, 32>}, {transform_indices = @transform_10, window_bounds = array<i64: 1, 4, 8, 32>}, {transform_indices = @transform_11, window_bounds = array<i64: 1, 1, 32>}, {transform_indices = @transform_12, window_bounds = array<i64: 1, 1, 32>}, {transform_indices = @transform_13, window_bounds = array<i64: 1, 1, 32>}, {transform_indices = @transform_14, window_bounds = array<i64: 1, 32, 128>}, {transform_indices = @transform_15, window_bounds = array<i64: 1, 1, 128>}, {transform_indices = @transform_16, window_bounds = array<i64: 1, 128, 32>}, {transform_indices = @transform_17, window_bounds = array<i64: 1, 1, 32>}, {pipeline_mode = #tpu.pipeline_mode<synchronous>, transform_indices = @transform_18, window_bounds = array<i64: 1, 32>}, {pipeline_mode = #tpu.pipeline_mode<synchronous>, transform_indices = @transform_19, window_bounds = array<i64: 1, 32>}, {transform_indices = @transform_20, window_bounds = array<i64: 8, 32>}]} {
    %c0_i32 = arith.constant 0 : i32
    %0 = arith.cmpi eq, %arg1, %c0_i32 : i32
    %1 = arith.extui %0 : i1 to i32
    %c0_i32_0 = arith.constant 0 : i32
    %2 = arith.cmpi ne, %1, %c0_i32_0 : i32
    scf.if %2 {
      %c0_102 = arith.constant 0 : index
      %c0_103 = arith.constant 0 : index
      %198 = vector.load %arg2[%c0_102, %c0_103] : memref<8x32xf32, #tpu.memory_space<vmem>>, vector<8x32xf32>
      %cst_104 = arith.constant 5.65685415 : f32
      %199 = vector.broadcast %cst_104 : f32 to vector<8x32xf32>
      %200 = arith.mulf %199, %198 : vector<8x32xf32>
      %c0_105 = arith.constant 0 : index
      %c0_106 = arith.constant 0 : index
      %201 = vector.load %arg3[%c0_105, %c0_106] : memref<8x32xf32, #tpu.memory_space<vmem>>, vector<8x32xf32>
      %202 = arith.addf %200, %201 : vector<8x32xf32>
      %c0_107 = arith.constant 0 : index
      %c0_108 = arith.constant 0 : index
      %203 = vector.load %arg22[%c0_107, %c0_108] : memref<8x32xf32, #tpu.memory_space<vmem>>, vector<8x32xf32>
      tpu.vector_store %arg22[%c0_107, %c0_108], %202 {strides = array<i32>} : memref<8x32xf32, #tpu.memory_space<vmem>>, vector<8x32xf32>,
    } else {
    }
    %c0 = arith.constant 0 : index
    %c0_1 = arith.constant 0 : index
    %3 = vector.load %arg22[%c0, %c0_1] : memref<8x32xf32, #tpu.memory_space<vmem>>, vector<8x32xf32>
    %c0_2 = arith.constant 0 : index
    %c0_3 = arith.constant 0 : index
    %c0_4 = arith.constant 0 : index
    %4 = vector.load %arg4[%c0_2, %c0_3, %c0_4] : memref<1x1x32xf32, #tpu.memory_space<vmem>>, vector<1x1x32xf32>
    %5 = vector.shape_cast %4 : vector<1x1x32xf32> to vector<1x32xf32>
    %c0_5 = arith.constant 0 : index
    %c0_6 = arith.constant 0 : index
    %c0_7 = arith.constant 0 : index
    %6 = vector.load %arg5[%c0_5, %c0_6, %c0_7] : memref<1x1x32xf32, #tpu.memory_space<vmem>>, vector<1x1x32xf32>
    %7 = vector.shape_cast %6 : vector<1x1x32xf32> to vector<1x32xf32>
    %cst = arith.constant dense<0.000000e+00> : vector<8xf32>
    %8 = vector.multi_reduction <add>, %3, %cst [1] : vector<8x32xf32> to vector<8xf32>
    %9 = vector.shape_cast %8 : vector<8xf32> to vector<8x1xf32>
    %cst_8 = arith.constant 3.200000e+01 : f32
    %10 = vector.broadcast %cst_8 : f32 to vector<8x1xf32>
    %11 = arith.divf %9, %10 : vector<8x1xf32>
    %12 = vector.broadcast %11 : vector<8x1xf32> to vector<8x32xf32>
    %13 = arith.subf %3, %12 : vector<8x32xf32>
    %14 = arith.mulf %13, %13 : vector<8x32xf32>
    %cst_9 = arith.constant dense<0.000000e+00> : vector<8xf32>
    %15 = vector.multi_reduction <add>, %14, %cst_9 [1] : vector<8x32xf32> to vector<8xf32>
    %16 = vector.shape_cast %15 : vector<8xf32> to vector<8x1xf32>
    %cst_10 = arith.constant 3.200000e+01 : f32
    %17 = vector.broadcast %cst_10 : f32 to vector<8x1xf32>
    %18 = arith.divf %16, %17 : vector<8x1xf32>
    %19 = vector.broadcast %11 : vector<8x1xf32> to vector<8x32xf32>
    %20 = arith.subf %3, %19 : vector<8x32xf32>
    %cst_11 = arith.constant 9.99999974E-6 : f32
    %21 = vector.broadcast %cst_11 : f32 to vector<8x1xf32>
    %22 = arith.addf %18, %21 : vector<8x1xf32>
    %23 = math.rsqrt %22 : vector<8x1xf32>
    %24 = vector.broadcast %23 : vector<8x1xf32> to vector<8x32xf32>
    %25 = arith.mulf %20, %24 : vector<8x32xf32>
    %26 = vector.broadcast %5 : vector<1x32xf32> to vector<8x32xf32>
    %27 = arith.mulf %25, %26 : vector<8x32xf32>
    %28 = vector.broadcast %7 : vector<1x32xf32> to vector<8x32xf32>
    %29 = arith.addf %27, %28 : vector<8x32xf32>
    %30 = arith.truncf %29 : vector<8x32xf32> to vector<8x32xbf16>
    %c0_12 = arith.constant 0 : index
    %c0_13 = arith.constant 0 : index
    %c0_14 = arith.constant 0 : index
    %31 = vector.load %arg6[%c0_12, %c0_13, %c0_14] : memref<1x32x32xbf16, #tpu.memory_space<vmem>>, vector<1x32x32xbf16>
    %32 = vector.shape_cast %31 : vector<1x32x32xbf16> to vector<32x32xbf16>
    %cst_15 = arith.constant dense<0.000000e+00> : vector<8x32xf32>
    %33 = tpu.matmul %30, %32, %cst_15 {dimension_numbers = #tpu.dot_dimension_numbers<[1], [0], [0], [1], [0, 0, 1, 1], [], []>} : vector<8x32xbf16>, vector<32x32xbf16>, vector<8x32xf32> -> vector<8x32xf32>
    %c0_16 = arith.constant 0 : index
    %c0_17 = arith.constant 0 : index
    %c0_18 = arith.constant 0 : index
    %34 = vector.load %arg9[%c0_16, %c0_17, %c0_18] : memref<1x1x32xf32, #tpu.memory_space<vmem>>, vector<1x1x32xf32>
    %35 = vector.shape_cast %34 : vector<1x1x32xf32> to vector<1x32xf32>
    %36 = vector.broadcast %35 : vector<1x32xf32> to vector<8x32xf32>
    %37 = arith.addf %33, %36 : vector<8x32xf32>
    %c0_19 = arith.constant 0 : index
    %c0_20 = arith.constant 0 : index
    %c0_21 = arith.constant 0 : index
    %38 = vector.load %arg7[%c0_19, %c0_20, %c0_21] : memref<1x32x32xbf16, #tpu.memory_space<vmem>>, vector<1x32x32xbf16>
    %39 = vector.shape_cast %38 : vector<1x32x32xbf16> to vector<32x32xbf16>
    %cst_22 = arith.constant dense<0.000000e+00> : vector<8x32xf32>
    %40 = tpu.matmul %30, %39, %cst_22 {dimension_numbers = #tpu.dot_dimension_numbers<[1], [0], [0], [1], [0, 0, 1, 1], [], []>} : vector<8x32xbf16>, vector<32x32xbf16>, vector<8x32xf32> -> vector<8x32xf32>
    %c0_23 = arith.constant 0 : index
    %c0_24 = arith.constant 0 : index
    %c0_25 = arith.constant 0 : index
    %41 = vector.load %arg10[%c0_23, %c0_24, %c0_25] : memref<1x1x32xf32, #tpu.memory_space<vmem>>, vector<1x1x32xf32>
    %42 = vector.shape_cast %41 : vector<1x1x32xf32> to vector<1x32xf32>
    %43 = vector.broadcast %42 : vector<1x32xf32> to vector<8x32xf32>
    %44 = arith.addf %40, %43 : vector<8x32xf32>
    %c0_26 = arith.constant 0 : index
    %c0_27 = arith.constant 0 : index
    %c0_28 = arith.constant 0 : index
    %45 = vector.load %arg8[%c0_26, %c0_27, %c0_28] : memref<1x32x32xbf16, #tpu.memory_space<vmem>>, vector<1x32x32xbf16>
    %46 = vector.shape_cast %45 : vector<1x32x32xbf16> to vector<32x32xbf16>
    %cst_29 = arith.constant dense<0.000000e+00> : vector<8x32xf32>
    %47 = tpu.matmul %30, %46, %cst_29 {dimension_numbers = #tpu.dot_dimension_numbers<[1], [0], [0], [1], [0, 0, 1, 1], [], []>} : vector<8x32xbf16>, vector<32x32xbf16>, vector<8x32xf32> -> vector<8x32xf32>
    %c0_30 = arith.constant 0 : index
    %c0_31 = arith.constant 0 : index
    %c0_32 = arith.constant 0 : index
    %48 = vector.load %arg11[%c0_30, %c0_31, %c0_32] : memref<1x1x32xf32, #tpu.memory_space<vmem>>, vector<1x1x32xf32>
    %49 = vector.shape_cast %48 : vector<1x1x32xf32> to vector<1x32xf32>
    %50 = vector.broadcast %49 : vector<1x32xf32> to vector<8x32xf32>
    %51 = arith.addf %47, %50 : vector<8x32xf32>
    %cst_33 = arith.constant 0.000000e+00 : f32
    %52 = vector.broadcast %cst_33 : f32 to vector<8x32xf32>
    %53 = vector.extract_strided_slice %37 {offsets = [0, 0], sizes = [8, 8], strides = [1, 1]} : vector<8x32xf32> to vector<8x8xf32>
    %54 = vector.extract_strided_slice %44 {offsets = [0, 0], sizes = [8, 8], strides = [1, 1]} : vector<8x32xf32> to vector<8x8xf32>
    %55 = vector.extract_strided_slice %51 {offsets = [0, 0], sizes = [8, 8], strides = [1, 1]} : vector<8x32xf32> to vector<8x8xf32>
    %cst_34 = arith.constant dense<0.000000e+00> : vector<8x8xf32>
    %56 = tpu.matmul %53, %54, %cst_34 {dimension_numbers = #tpu.dot_dimension_numbers<[1], [1], [0], [0], [0, 0, 1, 0], [], []>} : vector<8x8xf32>, vector<8x8xf32>, vector<8x8xf32> -> vector<8x8xf32>
    %cst_35 = arith.constant dense<0xFF800000> : vector<8xf32>
    %57 = vector.multi_reduction <maximumf>, %56, %cst_35 [1] : vector<8x8xf32> to vector<8xf32>
    %58 = vector.shape_cast %57 : vector<8xf32> to vector<8x1xf32>
    %59 = vector.broadcast %58 : vector<8x1xf32> to vector<8x8xf32>
    %60 = arith.subf %56, %59 : vector<8x8xf32>
    %61 = math.exp %60 : vector<8x8xf32>
    %cst_36 = arith.constant dense<0.000000e+00> : vector<8xf32>
    %62 = vector.multi_reduction <add>, %61, %cst_36 [1] : vector<8x8xf32> to vector<8xf32>
    %63 = vector.shape_cast %62 : vector<8xf32> to vector<8x1xf32>
    %64 = tpu.reciprocal %63 {approx = true} : vector<8x1xf32> -> vector<8x1xf32>
    %65 = vector.broadcast %64 : vector<8x1xf32> to vector<8x8xf32>
    %66 = arith.mulf %61, %65 : vector<8x8xf32>
    %cst_37 = arith.constant dense<0.000000e+00> : vector<8x8xf32>
    %67 = tpu.matmul %66, %55, %cst_37 {dimension_numbers = #tpu.dot_dimension_numbers<[1], [0], [0], [1], [0, 0, 1, 1], [], []>} : vector<8x8xf32>, vector<8x8xf32>, vector<8x8xf32> -> vector<8x8xf32>
    %68 = arith.truncf %67 : vector<8x8xf32> to vector<8x8xbf16>
    %c0_38 = arith.constant 0 : index
    %c0_39 = arith.constant 0 : index
    %c0_40 = arith.constant 0 : index
    %c0_41 = arith.constant 0 : index
    %69 = vector.load %arg12[%c0_38, %c0_39, %c0_40, %c0_41] : memref<1x4x8x32xbf16, #tpu.memory_space<vmem>>, vector<1x1x8x32xbf16>
    %70 = vector.shape_cast %69 : vector<1x1x8x32xbf16> to vector<8x32xbf16>
    %cst_42 = arith.constant dense<0.000000e+00> : vector<8x32xf32>
    %71 = tpu.matmul %68, %70, %cst_42 {dimension_numbers = #tpu.dot_dimension_numbers<[1], [0], [0], [1], [0, 0, 1, 1], [], []>} : vector<8x8xbf16>, vector<8x32xbf16>, vector<8x32xf32> -> vector<8x32xf32>
    %72 = arith.addf %52, %71 : vector<8x32xf32>
    %73 = vector.extract_strided_slice %37 {offsets = [0, 8], sizes = [8, 8], strides = [1, 1]} : vector<8x32xf32> to vector<8x8xf32>
    %74 = vector.extract_strided_slice %44 {offsets = [0, 8], sizes = [8, 8], strides = [1, 1]} : vector<8x32xf32> to vector<8x8xf32>
    %75 = vector.extract_strided_slice %51 {offsets = [0, 8], sizes = [8, 8], strides = [1, 1]} : vector<8x32xf32> to vector<8x8xf32>
    %cst_43 = arith.constant dense<0.000000e+00> : vector<8x8xf32>
    %76 = tpu.matmul %73, %74, %cst_43 {dimension_numbers = #tpu.dot_dimension_numbers<[1], [1], [0], [0], [0, 0, 1, 0], [], []>} : vector<8x8xf32>, vector<8x8xf32>, vector<8x8xf32> -> vector<8x8xf32>
    %cst_44 = arith.constant dense<0xFF800000> : vector<8xf32>
    %77 = vector.multi_reduction <maximumf>, %76, %cst_44 [1] : vector<8x8xf32> to vector<8xf32>
    %78 = vector.shape_cast %77 : vector<8xf32> to vector<8x1xf32>
    %79 = vector.broadcast %78 : vector<8x1xf32> to vector<8x8xf32>
    %80 = arith.subf %76, %79 : vector<8x8xf32>
    %81 = math.exp %80 : vector<8x8xf32>
    %cst_45 = arith.constant dense<0.000000e+00> : vector<8xf32>
    %82 = vector.multi_reduction <add>, %81, %cst_45 [1] : vector<8x8xf32> to vector<8xf32>
    %83 = vector.shape_cast %82 : vector<8xf32> to vector<8x1xf32>
    %84 = tpu.reciprocal %83 {approx = true} : vector<8x1xf32> -> vector<8x1xf32>
    %85 = vector.broadcast %84 : vector<8x1xf32> to vector<8x8xf32>
    %86 = arith.mulf %81, %85 : vector<8x8xf32>
    %cst_46 = arith.constant dense<0.000000e+00> : vector<8x8xf32>
    %87 = tpu.matmul %86, %75, %cst_46 {dimension_numbers = #tpu.dot_dimension_numbers<[1], [0], [0], [1], [0, 0, 1, 1], [], []>} : vector<8x8xf32>, vector<8x8xf32>, vector<8x8xf32> -> vector<8x8xf32>
    %88 = arith.truncf %87 : vector<8x8xf32> to vector<8x8xbf16>
    %c0_47 = arith.constant 0 : index
    %c1 = arith.constant 1 : index
    %c0_48 = arith.constant 0 : index
    %c0_49 = arith.constant 0 : index
    %89 = vector.load %arg12[%c0_47, %c1, %c0_48, %c0_49] : memref<1x4x8x32xbf16, #tpu.memory_space<vmem>>, vector<1x1x8x32xbf16>
    %90 = vector.shape_cast %89 : vector<1x1x8x32xbf16> to vector<8x32xbf16>
    %cst_50 = arith.constant dense<0.000000e+00> : vector<8x32xf32>
    %91 = tpu.matmul %88, %90, %cst_50 {dimension_numbers = #tpu.dot_dimension_numbers<[1], [0], [0], [1], [0, 0, 1, 1], [], []>} : vector<8x8xbf16>, vector<8x32xbf16>, vector<8x32xf32> -> vector<8x32xf32>
    %92 = arith.addf %72, %91 : vector<8x32xf32>
    %93 = vector.extract_strided_slice %37 {offsets = [0, 16], sizes = [8, 8], strides = [1, 1]} : vector<8x32xf32> to vector<8x8xf32>
    %94 = vector.extract_strided_slice %44 {offsets = [0, 16], sizes = [8, 8], strides = [1, 1]} : vector<8x32xf32> to vector<8x8xf32>
    %95 = vector.extract_strided_slice %51 {offsets = [0, 16], sizes = [8, 8], strides = [1, 1]} : vector<8x32xf32> to vector<8x8xf32>
    %cst_51 = arith.constant dense<0.000000e+00> : vector<8x8xf32>
    %96 = tpu.matmul %93, %94, %cst_51 {dimension_numbers = #tpu.dot_dimension_numbers<[1], [1], [0], [0], [0, 0, 1, 0], [], []>} : vector<8x8xf32>, vector<8x8xf32>, vector<8x8xf32> -> vector<8x8xf32>
    %cst_52 = arith.constant dense<0xFF800000> : vector<8xf32>
    %97 = vector.multi_reduction <maximumf>, %96, %cst_52 [1] : vector<8x8xf32> to vector<8xf32>
    %98 = vector.shape_cast %97 : vector<8xf32> to vector<8x1xf32>
    %99 = vector.broadcast %98 : vector<8x1xf32> to vector<8x8xf32>
    %100 = arith.subf %96, %99 : vector<8x8xf32>
    %101 = math.exp %100 : vector<8x8xf32>
    %cst_53 = arith.constant dense<0.000000e+00> : vector<8xf32>
    %102 = vector.multi_reduction <add>, %101, %cst_53 [1] : vector<8x8xf32> to vector<8xf32>
    %103 = vector.shape_cast %102 : vector<8xf32> to vector<8x1xf32>
    %104 = tpu.reciprocal %103 {approx = true} : vector<8x1xf32> -> vector<8x1xf32>
    %105 = vector.broadcast %104 : vector<8x1xf32> to vector<8x8xf32>
    %106 = arith.mulf %101, %105 : vector<8x8xf32>
    %cst_54 = arith.constant dense<0.000000e+00> : vector<8x8xf32>
    %107 = tpu.matmul %106, %95, %cst_54 {dimension_numbers = #tpu.dot_dimension_numbers<[1], [0], [0], [1], [0, 0, 1, 1], [], []>} : vector<8x8xf32>, vector<8x8xf32>, vector<8x8xf32> -> vector<8x8xf32>
    %108 = arith.truncf %107 : vector<8x8xf32> to vector<8x8xbf16>
    %c0_55 = arith.constant 0 : index
    %c2 = arith.constant 2 : index
    %c0_56 = arith.constant 0 : index
    %c0_57 = arith.constant 0 : index
    %109 = vector.load %arg12[%c0_55, %c2, %c0_56, %c0_57] : memref<1x4x8x32xbf16, #tpu.memory_space<vmem>>, vector<1x1x8x32xbf16>
    %110 = vector.shape_cast %109 : vector<1x1x8x32xbf16> to vector<8x32xbf16>
    %cst_58 = arith.constant dense<0.000000e+00> : vector<8x32xf32>
    %111 = tpu.matmul %108, %110, %cst_58 {dimension_numbers = #tpu.dot_dimension_numbers<[1], [0], [0], [1], [0, 0, 1, 1], [], []>} : vector<8x8xbf16>, vector<8x32xbf16>, vector<8x32xf32> -> vector<8x32xf32>
    %112 = arith.addf %92, %111 : vector<8x32xf32>
    %113 = vector.extract_strided_slice %37 {offsets = [0, 24], sizes = [8, 8], strides = [1, 1]} : vector<8x32xf32> to vector<8x8xf32>
    %114 = vector.extract_strided_slice %44 {offsets = [0, 24], sizes = [8, 8], strides = [1, 1]} : vector<8x32xf32> to vector<8x8xf32>
    %115 = vector.extract_strided_slice %51 {offsets = [0, 24], sizes = [8, 8], strides = [1, 1]} : vector<8x32xf32> to vector<8x8xf32>
    %cst_59 = arith.constant dense<0.000000e+00> : vector<8x8xf32>
    %116 = tpu.matmul %113, %114, %cst_59 {dimension_numbers = #tpu.dot_dimension_numbers<[1], [1], [0], [0], [0, 0, 1, 0], [], []>} : vector<8x8xf32>, vector<8x8xf32>, vector<8x8xf32> -> vector<8x8xf32>
    %cst_60 = arith.constant dense<0xFF800000> : vector<8xf32>
    %117 = vector.multi_reduction <maximumf>, %116, %cst_60 [1] : vector<8x8xf32> to vector<8xf32>
    %118 = vector.shape_cast %117 : vector<8xf32> to vector<8x1xf32>
    %119 = vector.broadcast %118 : vector<8x1xf32> to vector<8x8xf32>
    %120 = arith.subf %116, %119 : vector<8x8xf32>
    %121 = math.exp %120 : vector<8x8xf32>
    %cst_61 = arith.constant dense<0.000000e+00> : vector<8xf32>
    %122 = vector.multi_reduction <add>, %121, %cst_61 [1] : vector<8x8xf32> to vector<8xf32>
    %123 = vector.shape_cast %122 : vector<8xf32> to vector<8x1xf32>
    %124 = tpu.reciprocal %123 {approx = true} : vector<8x1xf32> -> vector<8x1xf32>
    %125 = vector.broadcast %124 : vector<8x1xf32> to vector<8x8xf32>
    %126 = arith.mulf %121, %125 : vector<8x8xf32>
    %cst_62 = arith.constant dense<0.000000e+00> : vector<8x8xf32>
    %127 = tpu.matmul %126, %115, %cst_62 {dimension_numbers = #tpu.dot_dimension_numbers<[1], [0], [0], [1], [0, 0, 1, 1], [], []>} : vector<8x8xf32>, vector<8x8xf32>, vector<8x8xf32> -> vector<8x8xf32>
    %128 = arith.truncf %127 : vector<8x8xf32> to vector<8x8xbf16>
    %c0_63 = arith.constant 0 : index
    %c3 = arith.constant 3 : index
    %c0_64 = arith.constant 0 : index
    %c0_65 = arith.constant 0 : index
    %129 = vector.load %arg12[%c0_63, %c3, %c0_64, %c0_65] : memref<1x4x8x32xbf16, #tpu.memory_space<vmem>>, vector<1x1x8x32xbf16>
    %130 = vector.shape_cast %129 : vector<1x1x8x32xbf16> to vector<8x32xbf16>
    %cst_66 = arith.constant dense<0.000000e+00> : vector<8x32xf32>
    %131 = tpu.matmul %128, %130, %cst_66 {dimension_numbers = #tpu.dot_dimension_numbers<[1], [0], [0], [1], [0, 0, 1, 1], [], []>} : vector<8x8xbf16>, vector<8x32xbf16>, vector<8x32xf32> -> vector<8x32xf32>
    %132 = arith.addf %112, %131 : vector<8x32xf32>
    %c0_67 = arith.constant 0 : index
    %c0_68 = arith.constant 0 : index
    %c0_69 = arith.constant 0 : index
    %133 = vector.load %arg13[%c0_67, %c0_68, %c0_69] : memref<1x1x32xf32, #tpu.memory_space<vmem>>, vector<1x1x32xf32>
    %134 = vector.shape_cast %133 : vector<1x1x32xf32> to vector<1x32xf32>
    %135 = vector.broadcast %134 : vector<1x32xf32> to vector<8x32xf32>
    %136 = arith.addf %132, %135 : vector<8x32xf32>
    %137 = arith.addf %3, %136 : vector<8x32xf32>
    %c0_70 = arith.constant 0 : index
    %c0_71 = arith.constant 0 : index
    %c0_72 = arith.constant 0 : index
    %138 = vector.load %arg14[%c0_70, %c0_71, %c0_72] : memref<1x1x32xf32, #tpu.memory_space<vmem>>, vector<1x1x32xf32>
    %139 = vector.shape_cast %138 : vector<1x1x32xf32> to vector<1x32xf32>
    %c0_73 = arith.constant 0 : index
    %c0_74 = arith.constant 0 : index
    %c0_75 = arith.constant 0 : index
    %140 = vector.load %arg15[%c0_73, %c0_74, %c0_75] : memref<1x1x32xf32, #tpu.memory_space<vmem>>, vector<1x1x32xf32>
    %141 = vector.shape_cast %140 : vector<1x1x32xf32> to vector<1x32xf32>
    %cst_76 = arith.constant dense<0.000000e+00> : vector<8xf32>
    %142 = vector.multi_reduction <add>, %137, %cst_76 [1] : vector<8x32xf32> to vector<8xf32>
    %143 = vector.shape_cast %142 : vector<8xf32> to vector<8x1xf32>
    %cst_77 = arith.constant 3.200000e+01 : f32
    %144 = vector.broadcast %cst_77 : f32 to vector<8x1xf32>
    %145 = arith.divf %143, %144 : vector<8x1xf32>
    %146 = vector.broadcast %145 : vector<8x1xf32> to vector<8x32xf32>
    %147 = arith.subf %137, %146 : vector<8x32xf32>
    %148 = arith.mulf %147, %147 : vector<8x32xf32>
    %cst_78 = arith.constant dense<0.000000e+00> : vector<8xf32>
    %149 = vector.multi_reduction <add>, %148, %cst_78 [1] : vector<8x32xf32> to vector<8xf32>
    %150 = vector.shape_cast %149 : vector<8xf32> to vector<8x1xf32>
    %cst_79 = arith.constant 3.200000e+01 : f32
    %151 = vector.broadcast %cst_79 : f32 to vector<8x1xf32>
    %152 = arith.divf %150, %151 : vector<8x1xf32>
    %153 = vector.broadcast %145 : vector<8x1xf32> to vector<8x32xf32>
    %154 = arith.subf %137, %153 : vector<8x32xf32>
    %cst_80 = arith.constant 9.99999974E-6 : f32
    %155 = vector.broadcast %cst_80 : f32 to vector<8x1xf32>
    %156 = arith.addf %152, %155 : vector<8x1xf32>
    %157 = math.rsqrt %156 : vector<8x1xf32>
    %158 = vector.broadcast %157 : vector<8x1xf32> to vector<8x32xf32>
    %159 = arith.mulf %154, %158 : vector<8x32xf32>
    %160 = vector.broadcast %139 : vector<1x32xf32> to vector<8x32xf32>
    %161 = arith.mulf %159, %160 : vector<8x32xf32>
    %162 = vector.broadcast %141 : vector<1x32xf32> to vector<8x32xf32>
    %163 = arith.addf %161, %162 : vector<8x32xf32>
    %164 = arith.truncf %163 : vector<8x32xf32> to vector<8x32xbf16>
    %c0_81 = arith.constant 0 : index
    %c0_82 = arith.constant 0 : index
    %c0_83 = arith.constant 0 : index
    %165 = vector.load %arg16[%c0_81, %c0_82, %c0_83] : memref<1x32x128xbf16, #tpu.memory_space<vmem>>, vector<1x32x128xbf16>
    %166 = vector.shape_cast %165 : vector<1x32x128xbf16> to vector<32x128xbf16>
    %cst_84 = arith.constant dense<0.000000e+00> : vector<8x128xf32>
    %167 = tpu.matmul %164, %166, %cst_84 {dimension_numbers = #tpu.dot_dimension_numbers<[1], [0], [0], [1], [0, 0, 1, 1], [], []>} : vector<8x32xbf16>, vector<32x128xbf16>, vector<8x128xf32> -> vector<8x128xf32>
    %c0_85 = arith.constant 0 : index
    %c0_86 = arith.constant 0 : index
    %c0_87 = arith.constant 0 : index
    %168 = vector.load %arg17[%c0_85, %c0_86, %c0_87] : memref<1x1x128xf32, #tpu.memory_space<vmem>>, vector<1x1x128xf32>
    %169 = vector.shape_cast %168 : vector<1x1x128xf32> to vector<1x128xf32>
    %170 = vector.broadcast %169 : vector<1x128xf32> to vector<8x128xf32>
    %171 = arith.addf %167, %170 : vector<8x128xf32>
    %172 = arith.mulf %171, %171 : vector<8x128xf32>
    %173 = arith.mulf %171, %172 : vector<8x128xf32>
    %cst_88 = arith.constant 4.471500e-02 : f32
    %174 = vector.broadcast %cst_88 : f32 to vector<8x128xf32>
    %175 = arith.mulf %174, %173 : vector<8x128xf32>
    %176 = arith.addf %171, %175 : vector<8x128xf32>
    %cst_89 = arith.constant 0.797884583 : f32
    %177 = vector.broadcast %cst_89 : f32 to vector<8x128xf32>
    %178 = arith.mulf %177, %176 : vector<8x128xf32>
    %179 = math.tanh %178 : vector<8x128xf32>
    %cst_90 = arith.constant 1.000000e+00 : f32
    %180 = vector.broadcast %cst_90 : f32 to vector<8x128xf32>
    %181 = arith.addf %180, %179 : vector<8x128xf32>
    %cst_91 = arith.constant 5.000000e-01 : f32
    %182 = vector.broadcast %cst_91 : f32 to vector<8x128xf32>
    %183 = arith.mulf %182, %181 : vector<8x128xf32>
    %184 = arith.mulf %171, %183 : vector<8x128xf32>
    %185 = arith.truncf %184 : vector<8x128xf32> to vector<8x128xbf16>
    %c0_92 = arith.constant 0 : index
    %c0_93 = arith.constant 0 : index
    %c0_94 = arith.constant 0 : index
    %186 = vector.load %arg18[%c0_92, %c0_93, %c0_94] : memref<1x128x32xbf16, #tpu.memory_space<vmem>>, vector<1x128x32xbf16>
    %187 = vector.shape_cast %186 : vector<1x128x32xbf16> to vector<128x32xbf16>
    %cst_95 = arith.constant dense<0.000000e+00> : vector<8x32xf32>
    %188 = tpu.matmul %185, %187, %cst_95 {dimension_numbers = #tpu.dot_dimension_numbers<[1], [0], [0], [1], [0, 0, 1, 1], [], []>} : vector<8x128xbf16>, vector<128x32xbf16>, vector<8x32xf32> -> vector<8x32xf32>
    %c0_96 = arith.constant 0 : index
    %c0_97 = arith.constant 0 : index
    %c0_98 = arith.constant 0 : index
    %189 = vector.load %arg19[%c0_96, %c0_97, %c0_98] : memref<1x1x32xf32, #tpu.memory_space<vmem>>, vector<1x1x32xf32>
    %190 = vector.shape_cast %189 : vector<1x1x32xf32> to vector<1x32xf32>
    %191 = vector.broadcast %190 : vector<1x32xf32> to vector<8x32xf32>
    %192 = arith.addf %188, %191 : vector<8x32xf32>
    %193 = arith.addf %137, %192 : vector<8x32xf32>
    %c0_99 = arith.constant 0 : index
    %c0_100 = arith.constant 0 : index
    %194 = vector.load %arg22[%c0_99, %c0_100] : memref<8x32xf32, #tpu.memory_space<vmem>>, vector<8x32xf32>
    tpu.vector_store %arg22[%c0_99, %c0_100], %193 {strides = array<i32>} : memref<8x32xf32, #tpu.memory_space<vmem>>, vector<8x32xf32>,
    %c1_i32 = arith.constant 1 : i32
    %195 = arith.cmpi eq, %arg1, %c1_i32 : i32
    %196 = arith.extui %195 : i1 to i32
    %c0_i32_101 = arith.constant 0 : i32
    %197 = arith.cmpi ne, %196, %c0_i32_101 : i32
    scf.if %197 {
      %c0_102 = arith.constant 0 : index
      %c0_103 = arith.constant 0 : index
      %198 = vector.load %arg20[%c0_102, %c0_103] : memref<1x32xf32, #tpu.memory_space<vmem>>, vector<1x32xf32>
      %c0_104 = arith.constant 0 : index
      %c0_105 = arith.constant 0 : index
      %199 = vector.load %arg21[%c0_104, %c0_105] : memref<1x32xf32, #tpu.memory_space<vmem>>, vector<1x32xf32>
      %cst_106 = arith.constant dense<0.000000e+00> : vector<8xf32>
      %200 = vector.multi_reduction <add>, %193, %cst_106 [1] : vector<8x32xf32> to vector<8xf32>
      %201 = vector.shape_cast %200 : vector<8xf32> to vector<8x1xf32>
      %cst_107 = arith.constant 3.200000e+01 : f32
      %202 = vector.broadcast %cst_107 : f32 to vector<8x1xf32>
      %203 = arith.divf %201, %202 : vector<8x1xf32>
      %204 = vector.broadcast %203 : vector<8x1xf32> to vector<8x32xf32>
      %205 = arith.subf %193, %204 : vector<8x32xf32>
      %206 = arith.mulf %205, %205 : vector<8x32xf32>
      %cst_108 = arith.constant dense<0.000000e+00> : vector<8xf32>
      %207 = vector.multi_reduction <add>, %206, %cst_108 [1] : vector<8x32xf32> to vector<8xf32>
      %208 = vector.shape_cast %207 : vector<8xf32> to vector<8x1xf32>
      %cst_109 = arith.constant 3.200000e+01 : f32
      %209 = vector.broadcast %cst_109 : f32 to vector<8x1xf32>
      %210 = arith.divf %208, %209 : vector<8x1xf32>
      %211 = vector.broadcast %203 : vector<8x1xf32> to vector<8x32xf32>
      %212 = arith.subf %193, %211 : vector<8x32xf32>
      %cst_110 = arith.constant 9.99999974E-6 : f32
      %213 = vector.broadcast %cst_110 : f32 to vector<8x1xf32>
      %214 = arith.addf %210, %213 : vector<8x1xf32>
      %215 = math.rsqrt %214 : vector<8x1xf32>
      %216 = vector.broadcast %215 : vector<8x1xf32> to vector<8x32xf32>
      %217 = arith.mulf %212, %216 : vector<8x32xf32>
      %218 = vector.broadcast %198 : vector<1x32xf32> to vector<8x32xf32>
      %219 = arith.mulf %217, %218 : vector<8x32xf32>
      %220 = vector.broadcast %199 : vector<1x32xf32> to vector<8x32xf32>
      %221 = arith.addf %219, %220 : vector<8x32xf32>
      %c0_111 = arith.constant 0 : index
      %c0_112 = arith.constant 0 : index
      %222 = vector.load %arg22[%c0_111, %c0_112] : memref<8x32xf32, #tpu.memory_space<vmem>>, vector<8x32xf32>
      tpu.vector_store %arg22[%c0_111, %c0_112], %221 {strides = array<i32>} : memref<8x32xf32, #tpu.memory_space<vmem>>, vector<8x32xf32>,
    } else {
    }
    return
  }
  func.func @transform_0(%arg0: i32, %arg1: i32) -> (i32, i32) {
    %c0_i32 = arith.constant 0 : i32
    %c0_i32_0 = arith.constant 0 : i32
    return %arg0, %c0_i32 : i32, i32
  }
  func.func @transform_1(%arg0: i32, %arg1: i32) -> (i32, i32) {
    %c0_i32 = arith.constant 0 : i32
    %c0_i32_0 = arith.constant 0 : i32
    %c0_i32_1 = arith.constant 0 : i32
    return %c0_i32, %c0_i32_0 : i32, i32
  }
  func.func @transform_2(%arg0: i32, %arg1: i32) -> (i32, i32, i32) {
    %c0_i32 = arith.constant 0 : i32
    %c0_i32_0 = arith.constant 0 : i32
    %c0_i32_1 = arith.constant 0 : i32
    return %arg1, %c0_i32, %c0_i32_0 : i32, i32, i32
  }
  func.func @transform_3(%arg0: i32, %arg1: i32) -> (i32, i32, i32) {
    %c0_i32 = arith.constant 0 : i32
    %c0_i32_0 = arith.constant 0 : i32
    %c0_i32_1 = arith.constant 0 : i32
    return %arg1, %c0_i32, %c0_i32_0 : i32, i32, i32
  }
  func.func @transform_4(%arg0: i32, %arg1: i32) -> (i32, i32, i32) {
    %c0_i32 = arith.constant 0 : i32
    %c0_i32_0 = arith.constant 0 : i32
    %c0_i32_1 = arith.constant 0 : i32
    return %arg1, %c0_i32, %c0_i32_0 : i32, i32, i32
  }
  func.func @transform_5(%arg0: i32, %arg1: i32) -> (i32, i32, i32) {
    %c0_i32 = arith.constant 0 : i32
    %c0_i32_0 = arith.constant 0 : i32
    %c0_i32_1 = arith.constant 0 : i32
    return %arg1, %c0_i32, %c0_i32_0 : i32, i32, i32
  }
  func.func @transform_6(%arg0: i32, %arg1: i32) -> (i32, i32, i32) {
    %c0_i32 = arith.constant 0 : i32
    %c0_i32_0 = arith.constant 0 : i32
    %c0_i32_1 = arith.constant 0 : i32
    return %arg1, %c0_i32, %c0_i32_0 : i32, i32, i32
  }
  func.func @transform_7(%arg0: i32, %arg1: i32) -> (i32, i32, i32) {
    %c0_i32 = arith.constant 0 : i32
    %c0_i32_0 = arith.constant 0 : i32
    %c0_i32_1 = arith.constant 0 : i32
    return %arg1, %c0_i32, %c0_i32_0 : i32, i32, i32
  }
  func.func @transform_8(%arg0: i32, %arg1: i32) -> (i32, i32, i32) {
    %c0_i32 = arith.constant 0 : i32
    %c0_i32_0 = arith.constant 0 : i32
    %c0_i32_1 = arith.constant 0 : i32
    return %arg1, %c0_i32, %c0_i32_0 : i32, i32, i32
  }
  func.func @transform_9(%arg0: i32, %arg1: i32) -> (i32, i32, i32) {
    %c0_i32 = arith.constant 0 : i32
    %c0_i32_0 = arith.constant 0 : i32
    %c0_i32_1 = arith.constant 0 : i32
    return %arg1, %c0_i32, %c0_i32_0 : i32, i32, i32
  }
  func.func @transform_10(%arg0: i32, %arg1: i32) -> (i32, i32, i32, i32) {
    %c0_i32 = arith.constant 0 : i32
    %c0_i32_0 = arith.constant 0 : i32
    %c0_i32_1 = arith.constant 0 : i32
    %c0_i32_2 = arith.constant 0 : i32
    return %arg1, %c0_i32, %c0_i32_0, %c0_i32_1 : i32, i32, i32, i32
  }
  func.func @transform_11(%arg0: i32, %arg1: i32) -> (i32, i32, i32) {
    %c0_i32 = arith.constant 0 : i32
    %c0_i32_0 = arith.constant 0 : i32
    %c0_i32_1 = arith.constant 0 : i32
    return %arg1, %c0_i32, %c0_i32_0 : i32, i32, i32
  }
  func.func @transform_12(%arg0: i32, %arg1: i32) -> (i32, i32, i32) {
    %c0_i32 = arith.constant 0 : i32
    %c0_i32_0 = arith.constant 0 : i32
    %c0_i32_1 = arith.constant 0 : i32
    return %arg1, %c0_i32, %c0_i32_0 : i32, i32, i32
  }
  func.func @transform_13(%arg0: i32, %arg1: i32) -> (i32, i32, i32) {
    %c0_i32 = arith.constant 0 : i32
    %c0_i32_0 = arith.constant 0 : i32
    %c0_i32_1 = arith.constant 0 : i32
    return %arg1, %c0_i32, %c0_i32_0 : i32, i32, i32
  }
  func.func @transform_14(%arg0: i32, %arg1: i32) -> (i32, i32, i32) {
    %c0_i32 = arith.constant 0 : i32
    %c0_i32_0 = arith.constant 0 : i32
    %c0_i32_1 = arith.constant 0 : i32
    return %arg1, %c0_i32, %c0_i32_0 : i32, i32, i32
  }
  func.func @transform_15(%arg0: i32, %arg1: i32) -> (i32, i32, i32) {
    %c0_i32 = arith.constant 0 : i32
    %c0_i32_0 = arith.constant 0 : i32
    %c0_i32_1 = arith.constant 0 : i32
    return %arg1, %c0_i32, %c0_i32_0 : i32, i32, i32
  }
  func.func @transform_16(%arg0: i32, %arg1: i32) -> (i32, i32, i32) {
    %c0_i32 = arith.constant 0 : i32
    %c0_i32_0 = arith.constant 0 : i32
    %c0_i32_1 = arith.constant 0 : i32
    return %arg1, %c0_i32, %c0_i32_0 : i32, i32, i32
  }
  func.func @transform_17(%arg0: i32, %arg1: i32) -> (i32, i32, i32) {
    %c0_i32 = arith.constant 0 : i32
    %c0_i32_0 = arith.constant 0 : i32
    %c0_i32_1 = arith.constant 0 : i32
    return %arg1, %c0_i32, %c0_i32_0 : i32, i32, i32
  }
  func.func @transform_18(%arg0: i32, %arg1: i32) -> (i32, i32) {
    %c0_i32 = arith.constant 0 : i32
    %c0_i32_0 = arith.constant 0 : i32
    %c0_i32_1 = arith.constant 0 : i32
    return %c0_i32, %c0_i32_0 : i32, i32
  }
  func.func @transform_19(%arg0: i32, %arg1: i32) -> (i32, i32) {
    %c0_i32 = arith.constant 0 : i32
    %c0_i32_0 = arith.constant 0 : i32
    %c0_i32_1 = arith.constant 0 : i32
    return %c0_i32, %c0_i32_0 : i32, i32
  }
  func.func @transform_20(%arg0: i32, %arg1: i32) -> (i32, i32) {
    %c0_i32 = arith.constant 0 : i32
    %c0_i32_0 = arith.constant 0 : i32
    return %arg0, %c0_i32 : i32, i32
  }
}

</mosaic_0001>

<llo_original>
// kernel: tpu_custom_call.1
$region0: #{tpu_custom_call.1}
  #allocation0 [shape = 'u32[]', space=smem, size = 0x4, offset = 0x4, fixed_abs, tag = 'smem constant byte address 0x4 - core index']
  #allocation1 [shape = 'u32[144,128]{1,0:T(1,128)}', space=vmem, size = 0x12000, scoped, tag = 'internal scratch']
  %s0 = inlined_call_operand.hbm [shape: f32[16,32], index: 0, kind: input, shape index: {}]
  %s1 = inlined_call_operand.hbm [shape: f32[8,32], index: 1, kind: input, shape index: {}]
  %s2 = inlined_call_operand.vmem [shape: f32[2,1,32], index: 2, kind: input, shape index: {}]
  %s3 = inlined_call_operand.vmem [shape: f32[2,1,32], index: 3, kind: input, shape index: {}]
  %s4 = inlined_call_operand.vmem [shape: bf16[2,32,32], index: 4, kind: input, shape index: {}]
  %s5 = inlined_call_operand.vmem [shape: bf16[2,32,32], index: 5, kind: input, shape index: {}]
  %s6 = inlined_call_operand.vmem [shape: bf16[2,32,32], index: 6, kind: input, shape index: {}]
  %s7 = inlined_call_operand.vmem [shape: f32[2,1,32], index: 7, kind: input, shape index: {}]
  %s8 = inlined_call_operand.vmem [shape: f32[2,1,32], index: 8, kind: input, shape index: {}]
  %s9 = inlined_call_operand.vmem [shape: f32[2,1,32], index: 9, kind: input, shape index: {}]
  %s10 = inlined_call_operand.vmem [shape: bf16[2,4,8,32], index: 10, kind: input, shape index: {}]
  %s11 = inlined_call_operand.vmem [shape: f32[2,1,32], index: 11, kind: input, shape index: {}]
  %s12 = inlined_call_operand.vmem [shape: f32[2,1,32], index: 12, kind: input, shape index: {}]
  %s13 = inlined_call_operand.vmem [shape: f32[2,1,32], index: 13, kind: input, shape index: {}]
  %s14 = inlined_call_operand.vmem [shape: bf16[2,32,128], index: 14, kind: input, shape index: {}]
  %s15 = inlined_call_operand.vmem [shape: f32[2,1,128], index: 15, kind: input, shape index: {}]
  %s16 = inlined_call_operand.vmem [shape: bf16[2,128,32], index: 16, kind: input, shape index: {}]
  %s17 = inlined_call_operand.vmem [shape: f32[2,1,32], index: 17, kind: input, shape index: {}]
  %s18 = inlined_call_operand.vmem [shape: f32[1,32], index: 18, kind: input, shape index: {}]
  %s19 = inlined_call_operand.vmem [shape: f32[1,32], index: 19, kind: input, shape index: {}]
  %s20 = inlined_call_operand.hbm [shape: f32[16,32], index: 20, kind: output, shape index: {}]
  %s21 = sld [smem:[#allocation0]]
  $region129: #{tpu_custom_call.1} parent=0
    _
  %s23 = ssub.s32 1, %s21
  %s24 = scalar_select 0, %s23, %s21
  $region1: #{tpu_custom_call.1} parent=0
    #allocation2 [shape = 'u8[8192]{0}', space=vmem, size = 0x2000, scoped, tag = 'input window, operand 0']
    #allocation3 [shape = 's32[2]{0}', space=sflag, size = 0x8, scoped, tag = 'scoped memory for tpu_custom_call.1']
    #allocation4 [shape = 's32[2]{0}', space=sflag, size = 0x8, scoped, tag = 'scoped memory for tpu_custom_call.1']
    #allocation5 [shape = 'u8[4096]{0}', space=vmem, size = 0x1000, scoped, tag = 'input window, operand 1, single buffered']
    #allocation6 [shape = 's32[1]{0}', space=sflag, size = 0x4, scoped, tag = 'scoped memory for tpu_custom_call.1']
    #allocation7 [shape = 'u8[8192]{0}', space=vmem, size = 0x2000, scoped, tag = 'output window, operand 0']
    %25 = vsyncpa [#allocation3], 0
    %s26 = scalar_lea.sflag [#allocation3], 1
    %27 = vsyncpa %s26, 0
    %28 = vsyncpa [#allocation6], 0
    %29 = vsyncpa [#allocation4], 0
    %s30 = scalar_lea.sflag [#allocation4], 1
    %31 = vsyncpa %s30, 0
    loop: start=0, step=1, limit=6
    $region2: #{tpu_custom_call.1} parent=1 // loop_pre_header
      _
    $region3: #{tpu_custom_call.1} parent=1 // loop_header
      %s33 = sphi 0, %s37
      %p34 = scmp.ge.s32.totalorder %s33, 6
      %s40 = sphi 0, %s52
      %s41 = sphi 0, %s48
      %s42 = sphi 0, %s40
      %s43 = sphi 0, %s41
      %s44 = sphi 0, %s42
      %s45 = sphi 0, %s43
      %s55 = sphi 0, %s57
      %s58 = sphi 0, %s55
      %s59 = sphi 0, %s58
      %s75 = sphi 0, %s59
      %s79 = sphi 0, %s79
      %s81 = sphi 0, %s79
      %s82 = sphi 0, %s81
      %s96 = sphi 0, %s82
      %s102 = sphi 0, %s104
      %s105 = sphi 0, %s102
      %s106 = sphi 0, %s105
      %s122 = sphi 0, %s106
      %s128 = sphi 0, %s130
      %s131 = sphi 0, %s128
      %s132 = sphi 0, %s131
      %s148 = sphi 0, %s132
      %s154 = sphi 0, %s156
      %s157 = sphi 0, %s154
      %s158 = sphi 0, %s157
      %s174 = sphi 0, %s158
      %s180 = sphi 0, %s182
      %s183 = sphi 0, %s180
      %s184 = sphi 0, %s183
      %s200 = sphi 0, %s184
      %s206 = sphi 0, %s208
      %s209 = sphi 0, %s206
      %s210 = sphi 0, %s209
      %s226 = sphi 0, %s210
      %s232 = sphi 0, %s234
      %s235 = sphi 0, %s232
      %s236 = sphi 0, %s235
      %s252 = sphi 0, %s236
      %s258 = sphi 0, %s260
      %s261 = sphi 0, %s258
      %s262 = sphi 0, %s261
      %s278 = sphi 0, %s262
      %s284 = sphi 0, %s286
      %s287 = sphi 0, %s284
      %s288 = sphi 0, %s287
      %s304 = sphi 0, %s288
      %s310 = sphi 0, %s312
      %s313 = sphi 0, %s310
      %s314 = sphi 0, %s313
      %s330 = sphi 0, %s314
      %s336 = sphi 0, %s338
      %s339 = sphi 0, %s336
      %s340 = sphi 0, %s339
      %s356 = sphi 0, %s340
      %s362 = sphi 0, %s364
      %s365 = sphi 0, %s362
      %s366 = sphi 0, %s365
      %s382 = sphi 0, %s366
      %s388 = sphi 0, %s390
      %s391 = sphi 0, %s388
      %s392 = sphi 0, %s391
      %s408 = sphi 0, %s392
      %s414 = sphi 0, %s416
      %s417 = sphi 0, %s414
      %s418 = sphi 0, %s417
      %s434 = sphi 0, %s418
      %s440 = sphi 0, %s442
      %s443 = sphi 0, %s440
      %s444 = sphi 0, %s443
      %s460 = sphi 0, %s444
      %s466 = sphi 0, %s468
      %s469 = sphi 0, %s466
      %s470 = sphi 0, %s469
      %s486 = sphi 0, %s470
      %s492 = sphi 0, %s494
      %s495 = sphi 0, %s492
      %s496 = sphi 0, %s495
      %s512 = sphi 0, %s496
      %s516 = sphi 0, %s516
      %s518 = sphi 0, %s516
      %s519 = sphi 0, %s518
      %s533 = sphi 0, %s519
      %s537 = sphi 0, %s537
      %s539 = sphi 0, %s537
      %s540 = sphi 0, %s539
      %s554 = sphi 0, %s540
      %s560 = sphi 0, %s562
      %s563 = sphi 0, %s560
      %s564 = sphi 0, %s563
      %s580 = sphi 0, %s564
    $region4: #{tpu_custom_call.1} parent=1 // loop_header_branch
      %36 = sbr.rel (%p34) target = $region8
    $region5: #{tpu_custom_call.1} parent=1 // loop_body
      %s38 = ssub.s32 %s33, 1
      %s39 = ssub.s32 %s33, 2
      %s46 = sadd.s32 1, %s41
      %p47 = scmp.ge.s32.totalorder %s46, 2
      %s48 = scalar_select %p47, 0, %s46
      %s49 = sadd.s32 1, %s40
      %s50 = scalar_select %p47, %s49, %s40
      %p51 = scmp.ge.s32.totalorder %s50, 2
      %s52 = scalar_select %p51, 0, %s50
      %s53 = ssub.s32 %s40, %s52
      %p54 = scmp.eq.s32.totalorder %s53, 0
      %s56 = sadd.s32 %s55, 1
      %s57 = scalar_select %p54, %s55, %s56
      %p60 = pneg %p54
      %p61 = scmp.eq.s32.totalorder %s33, 3
      %p62 = por %p60, %p61
      %p63 = scmp.ne.s32.totalorder %s55, %s58
      %p64 = scmp.eq.s32.totalorder %s33, 0
      %p65 = por %p63, %p64
      %p66 = scmp.ne.s32.totalorder %s55, %s58
      %p67 = scmp.eq.s32.totalorder %s38, 3
      %p68 = por %p66, %p67
      %p69 = scmp.ne.s32.totalorder %s58, %s59
      %p70 = scmp.eq.s32.totalorder %s38, 0
      %p71 = por %p69, %p70
      %p72 = scmp.ne.s32.totalorder %s58, %s59
      %p73 = scmp.eq.s32.totalorder %s39, 3
      %p74 = por %p72, %p73
      %p76 = scmp.ne.s32.totalorder %s59, %s75
      %p77 = scmp.eq.s32.totalorder %s39, 0
      %p78 = por %p76, %p77
      %s80 = sadd.s32 %s79, 1
      %p83 = scmp.eq.s32.totalorder %s33, 3
      %p84 = scmp.ne.s32.totalorder %s79, %s81
      %p85 = scmp.eq.s32.totalorder %s33, 0
      %p86 = por %p84, %p85
      %p87 = scmp.ne.s32.totalorder %s79, %s81
      %p88 = scmp.eq.s32.totalorder %s38, 3
      %p89 = por %p87, %p88
      %p90 = scmp.ne.s32.totalorder %s81, %s82
      %p91 = scmp.eq.s32.totalorder %s38, 0
      %p92 = por %p90, %p91
      %p93 = scmp.ne.s32.totalorder %s81, %s82
      %p94 = scmp.eq.s32.totalorder %s39, 3
      %p95 = por %p93, %p94
      %p97 = scmp.ne.s32.totalorder %s82, %s96
      %p98 = scmp.eq.s32.totalorder %s39, 0
      %p99 = por %p97, %p98
      %s100 = ssub.s32 %s41, %s48
      %p101 = scmp.eq.s32.totalorder %s100, 0
      %s103 = sadd.s32 %s102, 1
      %s104 = scalar_select %p101, %s102, %s103
      %p107 = pneg %p101
      %p108 = scmp.eq.s32.totalorder %s33, 3
      %p109 = por %p107, %p108
      %p110 = scmp.ne.s32.totalorder %s102, %s105
      %p111 = scmp.eq.s32.totalorder %s33, 0
      %p112 = por %p110, %p111
      %p113 = scmp.ne.s32.totalorder %s102, %s105
      %p114 = scmp.eq.s32.totalorder %s38, 3
      %p115 = por %p113, %p114
      %p116 = scmp.ne.s32.totalorder %s105, %s106
      %p117 = scmp.eq.s32.totalorder %s38, 0
      %p118 = por %p116, %p117
      %p119 = scmp.ne.s32.totalorder %s105, %s106
      %p120 = scmp.eq.s32.totalorder %s39, 3
      %p121 = por %p119, %p120
      %p123 = scmp.ne.s32.totalorder %s106, %s122
      %p124 = scmp.eq.s32.totalorder %s39, 0
      %p125 = por %p123, %p124
      %s126 = ssub.s32 %s41, %s48
      %p127 = scmp.eq.s32.totalorder %s126, 0
      %s129 = sadd.s32 %s128, 1
      %s130 = scalar_select %p127, %s128, %s129
      %p133 = pneg %p127
      %p134 = scmp.eq.s32.totalorder %s33, 3
      %p135 = por %p133, %p134
      %p136 = scmp.ne.s32.totalorder %s128, %s131
      %p137 = scmp.eq.s32.totalorder %s33, 0
      %p138 = por %p136, %p137
      %p139 = scmp.ne.s32.totalorder %s128, %s131
      %p140 = scmp.eq.s32.totalorder %s38, 3
      %p141 = por %p139, %p140
      %p142 = scmp.ne.s32.totalorder %s131, %s132
      %p143 = scmp.eq.s32.totalorder %s38, 0
      %p144 = por %p142, %p143
      %p145 = scmp.ne.s32.totalorder %s131, %s132
      %p146 = scmp.eq.s32.totalorder %s39, 3
      %p147 = por %p145, %p146
      %p149 = scmp.ne.s32.totalorder %s132, %s148
      %p150 = scmp.eq.s32.totalorder %s39, 0
      %p151 = por %p149, %p150
      %s152 = ssub.s32 %s41, %s48
      %p153 = scmp.eq.s32.totalorder %s152, 0
      %s155 = sadd.s32 %s154, 1
      %s156 = scalar_select %p153, %s154, %s155
      %p159 = pneg %p153
      %p160 = scmp.eq.s32.totalorder %s33, 3
      %p161 = por %p159, %p160
      %p162 = scmp.ne.s32.totalorder %s154, %s157
      %p163 = scmp.eq.s32.totalorder %s33, 0
      %p164 = por %p162, %p163
      %p165 = scmp.ne.s32.totalorder %s154, %s157
      %p166 = scmp.eq.s32.totalorder %s38, 3
      %p167 = por %p165, %p166
      %p168 = scmp.ne.s32.totalorder %s157, %s158
      %p169 = scmp.eq.s32.totalorder %s38, 0
      %p170 = por %p168, %p169
      %p171 = scmp.ne.s32.totalorder %s157, %s158
      %p172 = scmp.eq.s32.totalorder %s39, 3
      %p173 = por %p171, %p172
      %p175 = scmp.ne.s32.totalorder %s158, %s174
      %p176 = scmp.eq.s32.totalorder %s39, 0
      %p177 = por %p175, %p176
      %s178 = ssub.s32 %s41, %s48
      %p179 = scmp.eq.s32.totalorder %s178, 0
      %s181 = sadd.s32 %s180, 1
      %s182 = scalar_select %p179, %s180, %s181
      %p185 = pneg %p179
      %p186 = scmp.eq.s32.totalorder %s33, 3
      %p187 = por %p185, %p186
      %p188 = scmp.ne.s32.totalorder %s180, %s183
      %p189 = scmp.eq.s32.totalorder %s33, 0
      %p190 = por %p188, %p189
      %p191 = scmp.ne.s32.totalorder %s180, %s183
      %p192 = scmp.eq.s32.totalorder %s38, 3
      %p193 = por %p191, %p192
      %p194 = scmp.ne.s32.totalorder %s183, %s184
      %p195 = scmp.eq.s32.totalorder %s38, 0
      %p196 = por %p194, %p195
      %p197 = scmp.ne.s32.totalorder %s183, %s184
      %p198 = scmp.eq.s32.totalorder %s39, 3
      %p199 = por %p197, %p198
      %p201 = scmp.ne.s32.totalorder %s184, %s200
      %p202 = scmp.eq.s32.totalorder %s39, 0
      %p203 = por %p201, %p202
      %s204 = ssub.s32 %s41, %s48
      %p205 = scmp.eq.s32.totalorder %s204, 0
      %s207 = sadd.s32 %s206, 1
      %s208 = scalar_select %p205, %s206, %s207
      %p211 = pneg %p205
      %p212 = scmp.eq.s32.totalorder %s33, 3
      %p213 = por %p211, %p212
      %p214 = scmp.ne.s32.totalorder %s206, %s209
      %p215 = scmp.eq.s32.totalorder %s33, 0
      %p216 = por %p214, %p215
      %p217 = scmp.ne.s32.totalorder %s206, %s209
      %p218 = scmp.eq.s32.totalorder %s38, 3
      %p219 = por %p217, %p218
      %p220 = scmp.ne.s32.totalorder %s209, %s210
      %p221 = scmp.eq.s32.totalorder %s38, 0
      %p222 = por %p220, %p221
      %p223 = scmp.ne.s32.totalorder %s209, %s210
      %p224 = scmp.eq.s32.totalorder %s39, 3
      %p225 = por %p223, %p224
      %p227 = scmp.ne.s32.totalorder %s210, %s226
      %p228 = scmp.eq.s32.totalorder %s39, 0
      %p229 = por %p227, %p228
      %s230 = ssub.s32 %s41, %s48
      %p231 = scmp.eq.s32.totalorder %s230, 0
      %s233 = sadd.s32 %s232, 1
      %s234 = scalar_select %p231, %s232, %s233
      %p237 = pneg %p231
      %p238 = scmp.eq.s32.totalorder %s33, 3
      %p239 = por %p237, %p238
      %p240 = scmp.ne.s32.totalorder %s232, %s235
      %p241 = scmp.eq.s32.totalorder %s33, 0
      %p242 = por %p240, %p241
      %p243 = scmp.ne.s32.totalorder %s232, %s235
      %p244 = scmp.eq.s32.totalorder %s38, 3
      %p245 = por %p243, %p244
      %p246 = scmp.ne.s32.totalorder %s235, %s236
      %p247 = scmp.eq.s32.totalorder %s38, 0
      %p248 = por %p246, %p247
      %p249 = scmp.ne.s32.totalorder %s235, %s236
      %p250 = scmp.eq.s32.totalorder %s39, 3
      %p251 = por %p249, %p250
      %p253 = scmp.ne.s32.totalorder %s236, %s252
      %p254 = scmp.eq.s32.totalorder %s39, 0
      %p255 = por %p253, %p254
      %s256 = ssub.s32 %s41, %s48
      %p257 = scmp.eq.s32.totalorder %s256, 0
      %s259 = sadd.s32 %s258, 1
      %s260 = scalar_select %p257, %s258, %s259
      %p263 = pneg %p257
      %p264 = scmp.eq.s32.totalorder %s33, 3
      %p265 = por %p263, %p264
      %p266 = scmp.ne.s32.totalorder %s258, %s261
      %p267 = scmp.eq.s32.totalorder %s33, 0
      %p268 = por %p266, %p267
      %p269 = scmp.ne.s32.totalorder %s258, %s261
      %p270 = scmp.eq.s32.totalorder %s38, 3
      %p271 = por %p269, %p270
      %p272 = scmp.ne.s32.totalorder %s261, %s262
      %p273 = scmp.eq.s32.totalorder %s38, 0
      %p274 = por %p272, %p273
      %p275 = scmp.ne.s32.totalorder %s261, %s262
      %p276 = scmp.eq.s32.totalorder %s39, 3
      %p277 = por %p275, %p276
      %p279 = scmp.ne.s32.totalorder %s262, %s278
      %p280 = scmp.eq.s32.totalorder %s39, 0
      %p281 = por %p279, %p280
      %s282 = ssub.s32 %s41, %s48
      %p283 = scmp.eq.s32.totalorder %s282, 0
      %s285 = sadd.s32 %s284, 1
      %s286 = scalar_select %p283, %s284, %s285
      %p289 = pneg %p283
      %p290 = scmp.eq.s32.totalorder %s33, 3
      %p291 = por %p289, %p290
      %p292 = scmp.ne.s32.totalorder %s284, %s287
      %p293 = scmp.eq.s32.totalorder %s33, 0
      %p294 = por %p292, %p293
      %p295 = scmp.ne.s32.totalorder %s284, %s287
      %p296 = scmp.eq.s32.totalorder %s38, 3
      %p297 = por %p295, %p296
      %p298 = scmp.ne.s32.totalorder %s287, %s288
      %p299 = scmp.eq.s32.totalorder %s38, 0
      %p300 = por %p298, %p299
      %p301 = scmp.ne.s32.totalorder %s287, %s288
      %p302 = scmp.eq.s32.totalorder %s39, 3
      %p303 = por %p301, %p302
      %p305 = scmp.ne.s32.totalorder %s288, %s304
      %p306 = scmp.eq.s32.totalorder %s39, 0
      %p307 = por %p305, %p306
      %s308 = ssub.s32 %s41, %s48
      %p309 = scmp.eq.s32.totalorder %s308, 0
      %s311 = sadd.s32 %s310, 1
      %s312 = scalar_select %p309, %s310, %s311
      %p315 = pneg %p309
      %p316 = scmp.eq.s32.totalorder %s33, 3
      %p317 = por %p315, %p316
      %p318 = scmp.ne.s32.totalorder %s310, %s313
      %p319 = scmp.eq.s32.totalorder %s33, 0
      %p320 = por %p318, %p319
      %p321 = scmp.ne.s32.totalorder %s310, %s313
      %p322 = scmp.eq.s32.totalorder %s38, 3
      %p323 = por %p321, %p322
      %p324 = scmp.ne.s32.totalorder %s313, %s314
      %p325 = scmp.eq.s32.totalorder %s38, 0
      %p326 = por %p324, %p325
      %p327 = scmp.ne.s32.totalorder %s313, %s314
      %p328 = scmp.eq.s32.totalorder %s39, 3
      %p329 = por %p327, %p328
      %p331 = scmp.ne.s32.totalorder %s314, %s330
      %p332 = scmp.eq.s32.totalorder %s39, 0
      %p333 = por %p331, %p332
      %s334 = ssub.s32 %s41, %s48
      %p335 = scmp.eq.s32.totalorder %s334, 0
      %s337 = sadd.s32 %s336, 1
      %s338 = scalar_select %p335, %s336, %s337
      %p341 = pneg %p335
      %p342 = scmp.eq.s32.totalorder %s33, 3
      %p343 = por %p341, %p342
      %p344 = scmp.ne.s32.totalorder %s336, %s339
      %p345 = scmp.eq.s32.totalorder %s33, 0
      %p346 = por %p344, %p345
      %p347 = scmp.ne.s32.totalorder %s336, %s339
      %p348 = scmp.eq.s32.totalorder %s38, 3
      %p349 = por %p347, %p348
      %p350 = scmp.ne.s32.totalorder %s339, %s340
      %p351 = scmp.eq.s32.totalorder %s38, 0
      %p352 = por %p350, %p351
      %p353 = scmp.ne.s32.totalorder %s339, %s340
      %p354 = scmp.eq.s32.totalorder %s39, 3
      %p355 = por %p353, %p354
      %p357 = scmp.ne.s32.totalorder %s340, %s356
      %p358 = scmp.eq.s32.totalorder %s39, 0
      %p359 = por %p357, %p358
      %s360 = ssub.s32 %s41, %s48
      %p361 = scmp.eq.s32.totalorder %s360, 0
      %s363 = sadd.s32 %s362, 1
      %s364 = scalar_select %p361, %s362, %s363
      %p367 = pneg %p361
      %p368 = scmp.eq.s32.totalorder %s33, 3
      %p369 = por %p367, %p368
      %p370 = scmp.ne.s32.totalorder %s362, %s365
      %p371 = scmp.eq.s32.totalorder %s33, 0
      %p372 = por %p370, %p371
      %p373 = scmp.ne.s32.totalorder %s362, %s365
      %p374 = scmp.eq.s32.totalorder %s38, 3
      %p375 = por %p373, %p374
      %p376 = scmp.ne.s32.totalorder %s365, %s366
      %p377 = scmp.eq.s32.totalorder %s38, 0
      %p378 = por %p376, %p377
      %p379 = scmp.ne.s32.totalorder %s365, %s366
      %p380 = scmp.eq.s32.totalorder %s39, 3
      %p381 = por %p379, %p380
      %p383 = scmp.ne.s32.totalorder %s366, %s382
      %p384 = scmp.eq.s32.totalorder %s39, 0
      %p385 = por %p383, %p384
      %s386 = ssub.s32 %s41, %s48
      %p387 = scmp.eq.s32.totalorder %s386, 0
      %s389 = sadd.s32 %s388, 1
      %s390 = scalar_select %p387, %s388, %s389
      %p393 = pneg %p387
      %p394 = scmp.eq.s32.totalorder %s33, 3
      %p395 = por %p393, %p394
      %p396 = scmp.ne.s32.totalorder %s388, %s391
      %p397 = scmp.eq.s32.totalorder %s33, 0
      %p398 = por %p396, %p397
      %p399 = scmp.ne.s32.totalorder %s388, %s391
      %p400 = scmp.eq.s32.totalorder %s38, 3
      %p401 = por %p399, %p400
      %p402 = scmp.ne.s32.totalorder %s391, %s392
      %p403 = scmp.eq.s32.totalorder %s38, 0
      %p404 = por %p402, %p403
      %p405 = scmp.ne.s32.totalorder %s391, %s392
      %p406 = scmp.eq.s32.totalorder %s39, 3
      %p407 = por %p405, %p406
      %p409 = scmp.ne.s32.totalorder %s392, %s408
      %p410 = scmp.eq.s32.totalorder %s39, 0
      %p411 = por %p409, %p410
      %s412 = ssub.s32 %s41, %s48
      %p413 = scmp.eq.s32.totalorder %s412, 0
      %s415 = sadd.s32 %s414, 1
      %s416 = scalar_select %p413, %s414, %s415
      %p419 = pneg %p413
      %p420 = scmp.eq.s32.totalorder %s33, 3
      %p421 = por %p419, %p420
      %p422 = scmp.ne.s32.totalorder %s414, %s417
      %p423 = scmp.eq.s32.totalorder %s33, 0
      %p424 = por %p422, %p423
      %p425 = scmp.ne.s32.totalorder %s414, %s417
      %p426 = scmp.eq.s32.totalorder %s38, 3
      %p427 = por %p425, %p426
      %p428 = scmp.ne.s32.totalorder %s417, %s418
      %p429 = scmp.eq.s32.totalorder %s38, 0
      %p430 = por %p428, %p429
      %p431 = scmp.ne.s32.totalorder %s417, %s418
      %p432 = scmp.eq.s32.totalorder %s39, 3
      %p433 = por %p431, %p432
      %p435 = scmp.ne.s32.totalorder %s418, %s434
      %p436 = scmp.eq.s32.totalorder %s39, 0
      %p437 = por %p435, %p436
      %s438 = ssub.s32 %s41, %s48
      %p439 = scmp.eq.s32.totalorder %s438, 0
      %s441 = sadd.s32 %s440, 1
      %s442 = scalar_select %p439, %s440, %s441
      %p445 = pneg %p439
      %p446 = scmp.eq.s32.totalorder %s33, 3
      %p447 = por %p445, %p446
      %p448 = scmp.ne.s32.totalorder %s440, %s443
      %p449 = scmp.eq.s32.totalorder %s33, 0
      %p450 = por %p448, %p449
      %p451 = scmp.ne.s32.totalorder %s440, %s443
      %p452 = scmp.eq.s32.totalorder %s38, 3
      %p453 = por %p451, %p452
      %p454 = scmp.ne.s32.totalorder %s443, %s444
      %p455 = scmp.eq.s32.totalorder %s38, 0
      %p456 = por %p454, %p455
      %p457 = scmp.ne.s32.totalorder %s443, %s444
      %p458 = scmp.eq.s32.totalorder %s39, 3
      %p459 = por %p457, %p458
      %p461 = scmp.ne.s32.totalorder %s444, %s460
      %p462 = scmp.eq.s32.totalorder %s39, 0
      %p463 = por %p461, %p462
      %s464 = ssub.s32 %s41, %s48
      %p465 = scmp.eq.s32.totalorder %s464, 0
      %s467 = sadd.s32 %s466, 1
      %s468 = scalar_select %p465, %s466, %s467
      %p471 = pneg %p465
      %p472 = scmp.eq.s32.totalorder %s33, 3
      %p473 = por %p471, %p472
      %p474 = scmp.ne.s32.totalorder %s466, %s469
      %p475 = scmp.eq.s32.totalorder %s33, 0
      %p476 = por %p474, %p475
      %p477 = scmp.ne.s32.totalorder %s466, %s469
      %p478 = scmp.eq.s32.totalorder %s38, 3
      %p479 = por %p477, %p478
      %p480 = scmp.ne.s32.totalorder %s469, %s470
      %p481 = scmp.eq.s32.totalorder %s38, 0
      %p482 = por %p480, %p481
      %p483 = scmp.ne.s32.totalorder %s469, %s470
      %p484 = scmp.eq.s32.totalorder %s39, 3
      %p485 = por %p483, %p484
      %p487 = scmp.ne.s32.totalorder %s470, %s486
      %p488 = scmp.eq.s32.totalorder %s39, 0
      %p489 = por %p487, %p488
      %s490 = ssub.s32 %s41, %s48
      %p491 = scmp.eq.s32.totalorder %s490, 0
      %s493 = sadd.s32 %s492, 1
      %s494 = scalar_select %p491, %s492, %s493
      %p497 = pneg %p491
      %p498 = scmp.eq.s32.totalorder %s33, 3
      %p499 = por %p497, %p498
      %p500 = scmp.ne.s32.totalorder %s492, %s495
      %p501 = scmp.eq.s32.totalorder %s33, 0
      %p502 = por %p500, %p501
      %p503 = scmp.ne.s32.totalorder %s492, %s495
      %p504 = scmp.eq.s32.totalorder %s38, 3
      %p505 = por %p503, %p504
      %p506 = scmp.ne.s32.totalorder %s495, %s496
      %p507 = scmp.eq.s32.totalorder %s38, 0
      %p508 = por %p506, %p507
      %p509 = scmp.ne.s32.totalorder %s495, %s496
      %p510 = scmp.eq.s32.totalorder %s39, 3
      %p511 = por %p509, %p510
      %p513 = scmp.ne.s32.totalorder %s496, %s512
      %p514 = scmp.eq.s32.totalorder %s39, 0
      %p515 = por %p513, %p514
      %s517 = sadd.s32 %s516, 1
      %p520 = scmp.eq.s32.totalorder %s33, 3
      %p521 = scmp.ne.s32.totalorder %s516, %s518
      %p522 = scmp.eq.s32.totalorder %s33, 0
      %p523 = por %p521, %p522
      %p524 = scmp.ne.s32.totalorder %s516, %s518
      %p525 = scmp.eq.s32.totalorder %s38, 3
      %p526 = por %p524, %p525
      %p527 = scmp.ne.s32.totalorder %s518, %s519
      %p528 = scmp.eq.s32.totalorder %s38, 0
      %p529 = por %p527, %p528
      %p530 = scmp.ne.s32.totalorder %s518, %s519
      %p531 = scmp.eq.s32.totalorder %s39, 3
      %p532 = por %p530, %p531
      %p534 = scmp.ne.s32.totalorder %s519, %s533
      %p535 = scmp.eq.s32.totalorder %s39, 0
      %p536 = por %p534, %p535
      %s538 = sadd.s32 %s537, 1
      %p541 = scmp.eq.s32.totalorder %s33, 3
      %p542 = scmp.ne.s32.totalorder %s537, %s539
      %p543 = scmp.eq.s32.totalorder %s33, 0
      %p544 = por %p542, %p543
      %p545 = scmp.ne.s32.totalorder %s537, %s539
      %p546 = scmp.eq.s32.totalorder %s38, 3
      %p547 = por %p545, %p546
      %p548 = scmp.ne.s32.totalorder %s539, %s540
      %p549 = scmp.eq.s32.totalorder %s38, 0
      %p550 = por %p548, %p549
      %p551 = scmp.ne.s32.totalorder %s539, %s540
      %p552 = scmp.eq.s32.totalorder %s39, 3
      %p553 = por %p551, %p552
      %p555 = scmp.ne.s32.totalorder %s540, %s554
      %p556 = scmp.eq.s32.totalorder %s39, 0
      %p557 = por %p555, %p556
      %s558 = ssub.s32 %s40, %s52
      %p559 = scmp.eq.s32.totalorder %s558, 0
      %s561 = sadd.s32 %s560, 1
      %s562 = scalar_select %p559, %s560, %s561
      %p565 = pneg %p559
      %p566 = scmp.eq.s32.totalorder %s33, 3
      %p567 = por %p565, %p566
      %p568 = scmp.ne.s32.totalorder %s560, %s563
      %p569 = scmp.eq.s32.totalorder %s33, 0
      %p570 = por %p568, %p569
      %p571 = scmp.ne.s32.totalorder %s560, %s563
      %p572 = scmp.eq.s32.totalorder %s38, 3
      %p573 = por %p571, %p572
      %p574 = scmp.ne.s32.totalorder %s563, %s564
      %p575 = scmp.eq.s32.totalorder %s38, 0
      %p576 = por %p574, %p575
      %p577 = scmp.ne.s32.totalorder %s563, %s564
      %p578 = scmp.eq.s32.totalorder %s39, 3
      %p579 = por %p577, %p578
      %p581 = scmp.ne.s32.totalorder %s564, %s580
      %p582 = scmp.eq.s32.totalorder %s39, 0
      %p583 = por %p581, %p582
      %p584 = scmp.le.s32.totalorder 1, %s33
      %p585 = scmp.lt.s32.totalorder %s33, 5
      %p586 = pnand %p584, %p585
      %p587 = pneg %p586
      // Predicated region
      $region9: #{tpu_custom_call.1} parent=5 // pred_check
        _
      $region10: #{tpu_custom_call.1} parent=5 // pred_check_branch
        %589 = sbr.rel (%p586) target = $region12
      $region11: #{tpu_custom_call.1} parent=5 // pred_region
        %s590 = ssub.s32 %s33, 1
        // Predicated region
        $region13: #{tpu_custom_call.1} parent=11 // pred_check
          %p591 = pneg %p92
        $region14: #{tpu_custom_call.1} parent=11 // pred_check_branch
          %593 = sbr.rel (%p591) target = $region16
        $region15: #{tpu_custom_call.1} parent=11 // pred_region
          %s595 = ssub.s32 128, 128
          %596 = vsyncadd [#allocation6], %s595
          %s598 = sshll.u32 [#allocation5], 4
          %s599 = int_to_ptr.vmem [resolvable:$true] %s598
          %601 = dma.hbm_to_vmem [thread:$0]  %s1, 128, %s599, [#allocation6]
        $region16: #{tpu_custom_call.1} parent=11 // pred_fallthru
          _
        // Predicated region
        $region17: #{tpu_custom_call.1} parent=11 // pred_check
          %p602 = pneg %p529
        $region18: #{tpu_custom_call.1} parent=11 // pred_check_branch
          %604 = sbr.rel (%p602) target = $region20
        $region19: #{tpu_custom_call.1} parent=11 // pred_region
          _
        $region20: #{tpu_custom_call.1} parent=11 // pred_fallthru
          _
        // Predicated region
        $region21: #{tpu_custom_call.1} parent=11 // pred_check
          %p605 = pneg %p550
        $region22: #{tpu_custom_call.1} parent=11 // pred_check_branch
          %607 = sbr.rel (%p605) target = $region24
        $region23: #{tpu_custom_call.1} parent=11 // pred_region
          _
        $region24: #{tpu_custom_call.1} parent=11 // pred_fallthru
          _
      $region12: #{tpu_custom_call.1} parent=5 // pred_fallthru
        _
      %p608 = scmp.lt.s32.totalorder %s33, 4
      // Predicated region
      $region25: #{tpu_custom_call.1} parent=5 // pred_check
        %p609 = pneg %p608
      $region26: #{tpu_custom_call.1} parent=5 // pred_check_branch
        %611 = sbr.rel (%p609) target = $region28
      $region27: #{tpu_custom_call.1} parent=5 // pred_region
        // Predicated region
        $region29: #{tpu_custom_call.1} parent=27 // pred_check
          %p612 = pneg %p65
        $region30: #{tpu_custom_call.1} parent=27 // pred_check_branch
          %614 = sbr.rel (%p612) target = $region32
        $region31: #{tpu_custom_call.1} parent=27 // pred_region
          %s615 = sand.u32 %s55, 1
          %s616 = scalar_lea.sflag [#allocation3], %s615
          %s617 = sand.u32 %s55, 1
          %s618 = smul.addr %s617, 8
          %s619 = scalar_lea.vmem [#allocation2], %s618
          %s621 = ssub.s32 128, 128
          %622 = vsyncadd %s616, %s621
          %s623 = smul.addr %s40, 128
          %s624 = scalar_lea.hbm %s0, %s623
          %s626 = sshll.u32 %s619, 4
          %s627 = int_to_ptr.vmem [resolvable:$true] %s626
          %629 = dma.hbm_to_vmem [thread:$0]  %s624, 128, %s627, %s616
        $region32: #{tpu_custom_call.1} parent=27 // pred_fallthru
          _
        // Predicated region
        $region33: #{tpu_custom_call.1} parent=27 // pred_check
          %p630 = pneg %p112
        $region34: #{tpu_custom_call.1} parent=27 // pred_check_branch
          %632 = sbr.rel (%p630) target = $region36
        $region35: #{tpu_custom_call.1} parent=27 // pred_region
          %p633 = scmp.lt.s32.totalorder %s41, 1
          %s634 = scalar_select %p633, %s41, 1
          %s635 = scalar_lea.vmem %s2, %s634
        $region36: #{tpu_custom_call.1} parent=27 // pred_fallthru
          _
        // Predicated region
        $region37: #{tpu_custom_call.1} parent=27 // pred_check
          %p636 = pneg %p138
        $region38: #{tpu_custom_call.1} parent=27 // pred_check_branch
          %638 = sbr.rel (%p636) target = $region40
        $region39: #{tpu_custom_call.1} parent=27 // pred_region
          %p639 = scmp.lt.s32.totalorder %s41, 1
          %s640 = scalar_select %p639, %s41, 1
          %s641 = scalar_lea.vmem %s3, %s640
        $region40: #{tpu_custom_call.1} parent=27 // pred_fallthru
          _
        // Predicated region
        $region41: #{tpu_custom_call.1} parent=27 // pred_check
          %p642 = pneg %p164
        $region42: #{tpu_custom_call.1} parent=27 // pred_check_branch
          %644 = sbr.rel (%p642) target = $region44
        $region43: #{tpu_custom_call.1} parent=27 // pred_region
          %p645 = scmp.lt.s32.totalorder %s41, 1
          %s646 = scalar_select %p645, %s41, 1
          %s647 = smul.addr %s646, 4
          %s648 = smul.addr %s647, 4
          %s649 = scalar_lea.vmem %s4, %s648
        $region44: #{tpu_custom_call.1} parent=27 // pred_fallthru
          _
        // Predicated region
        $region45: #{tpu_custom_call.1} parent=27 // pred_check
          %p650 = pneg %p190
        $region46: #{tpu_custom_call.1} parent=27 // pred_check_branch
          %652 = sbr.rel (%p650) target = $region48
        $region47: #{tpu_custom_call.1} parent=27 // pred_region
          %p653 = scmp.lt.s32.totalorder %s41, 1
          %s654 = scalar_select %p653, %s41, 1
          %s655 = smul.addr %s654, 4
          %s656 = smul.addr %s655, 4
          %s657 = scalar_lea.vmem %s5, %s656
        $region48: #{tpu_custom_call.1} parent=27 // pred_fallthru
          _
        // Predicated region
        $region49: #{tpu_custom_call.1} parent=27 // pred_check
          %p658 = pneg %p216
        $region50: #{tpu_custom_call.1} parent=27 // pred_check_branch
          %660 = sbr.rel (%p658) target = $region52
        $region51: #{tpu_custom_call.1} parent=27 // pred_region
          %p661 = scmp.lt.s32.totalorder %s41, 1
          %s662 = scalar_select %p661, %s41, 1
          %s663 = smul.addr %s662, 4
          %s664 = smul.addr %s663, 4
          %s665 = scalar_lea.vmem %s6, %s664
        $region52: #{tpu_custom_call.1} parent=27 // pred_fallthru
          _
        // Predicated region
        $region53: #{tpu_custom_call.1} parent=27 // pred_check
          %p666 = pneg %p242
        $region54: #{tpu_custom_call.1} parent=27 // pred_check_branch
          %668 = sbr.rel (%p666) target = $region56
        $region55: #{tpu_custom_call.1} parent=27 // pred_region
          %p669 = scmp.lt.s32.totalorder %s41, 1
          %s670 = scalar_select %p669, %s41, 1
          %s671 = scalar_lea.vmem %s7, %s670
        $region56: #{tpu_custom_call.1} parent=27 // pred_fallthru
          _
        // Predicated region
        $region57: #{tpu_custom_call.1} parent=27 // pred_check
          %p672 = pneg %p268
        $region58: #{tpu_custom_call.1} parent=27 // pred_check_branch
          %674 = sbr.rel (%p672) target = $region60
        $region59: #{tpu_custom_call.1} parent=27 // pred_region
          %p675 = scmp.lt.s32.totalorder %s41, 1
          %s676 = scalar_select %p675, %s41, 1
          %s677 = scalar_lea.vmem %s8, %s676
        $region60: #{tpu_custom_call.1} parent=27 // pred_fallthru
          _
        // Predicated region
        $region61: #{tpu_custom_call.1} parent=27 // pred_check
          %p678 = pneg %p294
        $region62: #{tpu_custom_call.1} parent=27 // pred_check_branch
          %680 = sbr.rel (%p678) target = $region64
        $region63: #{tpu_custom_call.1} parent=27 // pred_region
          %p681 = scmp.lt.s32.totalorder %s41, 1
          %s682 = scalar_select %p681, %s41, 1
          %s683 = scalar_lea.vmem %s9, %s682
        $region64: #{tpu_custom_call.1} parent=27 // pred_fallthru
          _
        // Predicated region
        $region65: #{tpu_custom_call.1} parent=27 // pred_check
          %p684 = pneg %p320
        $region66: #{tpu_custom_call.1} parent=27 // pred_check_branch
          %686 = sbr.rel (%p684) target = $region68
        $region67: #{tpu_custom_call.1} parent=27 // pred_region
          %p687 = scmp.lt.s32.totalorder %s41, 1
          %s688 = scalar_select %p687, %s41, 1
          %s689 = smul.addr %s688, 4
          %s690 = smul.addr %s689, 4
          %s691 = scalar_lea.vmem %s10, %s690
        $region68: #{tpu_custom_call.1} parent=27 // pred_fallthru
          _
        // Predicated region
        $region69: #{tpu_custom_call.1} parent=27 // pred_check
          %p692 = pneg %p346
        $region70: #{tpu_custom_call.1} parent=27 // pred_check_branch
          %694 = sbr.rel (%p692) target = $region72
        $region71: #{tpu_custom_call.1} parent=27 // pred_region
          %p695 = scmp.lt.s32.totalorder %s41, 1
          %s696 = scalar_select %p695, %s41, 1
          %s697 = scalar_lea.vmem %s11, %s696
        $region72: #{tpu_custom_call.1} parent=27 // pred_fallthru
          _
        // Predicated region
        $region73: #{tpu_custom_call.1} parent=27 // pred_check
          %p698 = pneg %p372
        $region74: #{tpu_custom_call.1} parent=27 // pred_check_branch
          %700 = sbr.rel (%p698) target = $region76
        $region75: #{tpu_custom_call.1} parent=27 // pred_region
          %p701 = scmp.lt.s32.totalorder %s41, 1
          %s702 = scalar_select %p701, %s41, 1
          %s703 = scalar_lea.vmem %s12, %s702
        $region76: #{tpu_custom_call.1} parent=27 // pred_fallthru
          _
        // Predicated region
        $region77: #{tpu_custom_call.1} parent=27 // pred_check
          %p704 = pneg %p398
        $region78: #{tpu_custom_call.1} parent=27 // pred_check_branch
          %706 = sbr.rel (%p704) target = $region80
        $region79: #{tpu_custom_call.1} parent=27 // pred_region
          %p707 = scmp.lt.s32.totalorder %s41, 1
          %s708 = scalar_select %p707, %s41, 1
          %s709 = scalar_lea.vmem %s13, %s708
        $region80: #{tpu_custom_call.1} parent=27 // pred_fallthru
          _
        // Predicated region
        $region81: #{tpu_custom_call.1} parent=27 // pred_check
          %p710 = pneg %p424
        $region82: #{tpu_custom_call.1} parent=27 // pred_check_branch
          %712 = sbr.rel (%p710) target = $region84
        $region83: #{tpu_custom_call.1} parent=27 // pred_region
          %p713 = scmp.lt.s32.totalorder %s41, 1
          %s714 = scalar_select %p713, %s41, 1
          %s715 = smul.addr %s714, 4
          %s716 = smul.addr %s715, 4
          %s717 = scalar_lea.vmem %s14, %s716
        $region84: #{tpu_custom_call.1} parent=27 // pred_fallthru
          _
        // Predicated region
        $region85: #{tpu_custom_call.1} parent=27 // pred_check
          %p718 = pneg %p450
        $region86: #{tpu_custom_call.1} parent=27 // pred_check_branch
          %720 = sbr.rel (%p718) target = $region88
        $region87: #{tpu_custom_call.1} parent=27 // pred_region
          %p721 = scmp.lt.s32.totalorder %s41, 1
          %s722 = scalar_select %p721, %s41, 1
          %s723 = scalar_lea.vmem %s15, %s722
        $region88: #{tpu_custom_call.1} parent=27 // pred_fallthru
          _
        // Predicated region
        $region89: #{tpu_custom_call.1} parent=27 // pred_check
          %p724 = pneg %p476
        $region90: #{tpu_custom_call.1} parent=27 // pred_check_branch
          %726 = sbr.rel (%p724) target = $region92
        $region91: #{tpu_custom_call.1} parent=27 // pred_region
          %p727 = scmp.lt.s32.totalorder %s41, 1
          %s728 = scalar_select %p727, %s41, 1
          %s729 = smul.addr %s728, 16
          %s730 = smul.addr %s729, 4
          %s731 = scalar_lea.vmem %s16, %s730
        $region92: #{tpu_custom_call.1} parent=27 // pred_fallthru
          _
        // Predicated region
        $region93: #{tpu_custom_call.1} parent=27 // pred_check
          %p732 = pneg %p502
        $region94: #{tpu_custom_call.1} parent=27 // pred_check_branch
          %734 = sbr.rel (%p732) target = $region96
        $region95: #{tpu_custom_call.1} parent=27 // pred_region
          %p735 = scmp.lt.s32.totalorder %s41, 1
          %s736 = scalar_select %p735, %s41, 1
          %s737 = scalar_lea.vmem %s17, %s736
        $region96: #{tpu_custom_call.1} parent=27 // pred_fallthru
          _
      $region28: #{tpu_custom_call.1} parent=5 // pred_fallthru
        _
      %p738 = scmp.le.s32.totalorder 1, %s33
      %p739 = scmp.lt.s32.totalorder %s33, 5
      %p740 = pnand %p738, %p739
      %p741 = pneg %p740
      // Predicated region
      $region97: #{tpu_custom_call.1} parent=5 // pred_check
        _
      $region98: #{tpu_custom_call.1} parent=5 // pred_check_branch
        %743 = sbr.rel (%p740) target = $region100
      $region99: #{tpu_custom_call.1} parent=5 // pred_region
        %s744 = ssub.s32 %s33, 1
        %s745 = sand.u32 %s58, 1
        %s746 = scalar_lea.sflag [#allocation3], %s745
        %s747 = sand.u32 %s58, 1
        %s748 = smul.addr %s747, 8
        %s749 = scalar_lea.vmem [#allocation2], %s748
        // Predicated region
        $region101: #{tpu_custom_call.1} parent=99 // pred_check
          %p750 = pneg %p71
        $region102: #{tpu_custom_call.1} parent=99 // pred_check_branch
          %752 = sbr.rel (%p750) target = $region104
        $region103: #{tpu_custom_call.1} parent=99 // pred_region
          %753 = dma.done %s746, 128
        $region104: #{tpu_custom_call.1} parent=99 // pred_fallthru
          _
        // Predicated region
        $region105: #{tpu_custom_call.1} parent=99 // pred_check
          %p754 = pneg %p92
        $region106: #{tpu_custom_call.1} parent=99 // pred_check_branch
          %756 = sbr.rel (%p754) target = $region108
        $region107: #{tpu_custom_call.1} parent=99 // pred_region
          %757 = dma.done [#allocation6], 128
        $region108: #{tpu_custom_call.1} parent=99 // pred_fallthru
          _
        %s758 = sand.u32 %s58, 1
        %s759 = scalar_lea.sflag [#allocation3], %s758
        %s760 = sand.u32 %s58, 1
        %s761 = smul.addr %s760, 8
        %s762 = scalar_lea.vmem [#allocation2], %s761
        %p763 = pneg %p71
        %p764 = pneg %p68
        %p765 = pneg %p92
        %p766 = pneg %p89
        %p767 = scmp.lt.s32.totalorder %s43, 1
        %s768 = scalar_select %p767, %s43, 1
        %s769 = scalar_lea.vmem %s2, %s768
        %p770 = pneg %p118
        %p771 = pneg %p115
        %p772 = scmp.lt.s32.totalorder %s43, 1
        %s773 = scalar_select %p772, %s43, 1
        %s774 = scalar_lea.vmem %s3, %s773
        %p775 = pneg %p144
        %p776 = pneg %p141
        %p777 = scmp.lt.s32.totalorder %s43, 1
        %s778 = scalar_select %p777, %s43, 1
        %s779 = smul.addr %s778, 4
        %s780 = smul.addr %s779, 4
        %s781 = scalar_lea.vmem %s4, %s780
        %p782 = pneg %p170
        %p783 = pneg %p167
        %p784 = scmp.lt.s32.totalorder %s43, 1
        %s785 = scalar_select %p784, %s43, 1
        %s786 = smul.addr %s785, 4
        %s787 = smul.addr %s786, 4
        %s788 = scalar_lea.vmem %s5, %s787
        %p789 = pneg %p196
        %p790 = pneg %p193
        %p791 = scmp.lt.s32.totalorder %s43, 1
        %s792 = scalar_select %p791, %s43, 1
        %s793 = smul.addr %s792, 4
        %s794 = smul.addr %s793, 4
        %s795 = scalar_lea.vmem %s6, %s794
        %p796 = pneg %p222
        %p797 = pneg %p219
        %p798 = scmp.lt.s32.totalorder %s43, 1
        %s799 = scalar_select %p798, %s43, 1
        %s800 = scalar_lea.vmem %s7, %s799
        %p801 = pneg %p248
        %p802 = pneg %p245
        %p803 = scmp.lt.s32.totalorder %s43, 1
        %s804 = scalar_select %p803, %s43, 1
        %s805 = scalar_lea.vmem %s8, %s804
        %p806 = pneg %p274
        %p807 = pneg %p271
        %p808 = scmp.lt.s32.totalorder %s43, 1
        %s809 = scalar_select %p808, %s43, 1
        %s810 = scalar_lea.vmem %s9, %s809
        %p811 = pneg %p300
        %p812 = pneg %p297
        %p813 = scmp.lt.s32.totalorder %s43, 1
        %s814 = scalar_select %p813, %s43, 1
        %s815 = smul.addr %s814, 4
        %s816 = smul.addr %s815, 4
        %s817 = scalar_lea.vmem %s10, %s816
        %p818 = pneg %p326
        %p819 = pneg %p323
        %p820 = scmp.lt.s32.totalorder %s43, 1
        %s821 = scalar_select %p820, %s43, 1
        %s822 = scalar_lea.vmem %s11, %s821
        %p823 = pneg %p352
        %p824 = pneg %p349
        %p825 = scmp.lt.s32.totalorder %s43, 1
        %s826 = scalar_select %p825, %s43, 1
        %s827 = scalar_lea.vmem %s12, %s826
        %p828 = pneg %p378
        %p829 = pneg %p375
        %p830 = scmp.lt.s32.totalorder %s43, 1
        %s831 = scalar_select %p830, %s43, 1
        %s832 = scalar_lea.vmem %s13, %s831
        %p833 = pneg %p404
        %p834 = pneg %p401
        %p835 = scmp.lt.s32.totalorder %s43, 1
        %s836 = scalar_select %p835, %s43, 1
        %s837 = smul.addr %s836, 4
        %s838 = smul.addr %s837, 4
        %s839 = scalar_lea.vmem %s14, %s838
        %p840 = pneg %p430
        %p841 = pneg %p427
        %p842 = scmp.lt.s32.totalorder %s43, 1
        %s843 = scalar_select %p842, %s43, 1
        %s844 = scalar_lea.vmem %s15, %s843
        %p845 = pneg %p456
        %p846 = pneg %p453
        %p847 = scmp.lt.s32.totalorder %s43, 1
        %s848 = scalar_select %p847, %s43, 1
        %s849 = smul.addr %s848, 16
        %s850 = smul.addr %s849, 4
        %s851 = scalar_lea.vmem %s16, %s850
        %p852 = pneg %p482
        %p853 = pneg %p479
        %p854 = scmp.lt.s32.totalorder %s43, 1
        %s855 = scalar_select %p854, %s43, 1
        %s856 = scalar_lea.vmem %s17, %s855
        %p857 = pneg %p508
        %p858 = pneg %p505
        %p859 = pneg %p529
        %p860 = pneg %p526
        %p861 = pneg %p550
        %p862 = pneg %p547
        %p863 = pneg %p576
        %p864 = pneg %p573
        %s865 = sand.u32 %s563, 1
        %s866 = scalar_lea.sflag [#allocation4], %s865
        %s867 = sand.u32 %s563, 1
        %s868 = smul.addr %s867, 8
        %s869 = scalar_lea.vmem [#allocation7], %s868
        %p870 = scmp.lt.s32.totalorder %s43, 1
        %s871 = scalar_select %p870, %s43, 1
        %s872 = scalar_lea.vmem %s2, %s871
        %p873 = scmp.lt.s32.totalorder %s43, 1
        %s874 = scalar_select %p873, %s43, 1
        %s875 = scalar_lea.vmem %s3, %s874
        %p876 = scmp.lt.s32.totalorder %s43, 1
        %s877 = scalar_select %p876, %s43, 1
        %s878 = smul.addr %s877, 4
        %s879 = smul.addr %s878, 4
        %s880 = scalar_lea.vmem %s4, %s879
        %p881 = scmp.lt.s32.totalorder %s43, 1
        %s882 = scalar_select %p881, %s43, 1
        %s883 = smul.addr %s882, 4
        %s884 = smul.addr %s883, 4
        %s885 = scalar_lea.vmem %s5, %s884
        %p886 = scmp.lt.s32.totalorder %s43, 1
        %s887 = scalar_select %p886, %s43, 1
        %s888 = smul.addr %s887, 4
        %s889 = smul.addr %s888, 4
        %s890 = scalar_lea.vmem %s6, %s889
        %p891 = scmp.lt.s32.totalorder %s43, 1
        %s892 = scalar_select %p891, %s43, 1
        %s893 = scalar_lea.vmem %s7, %s892
        %p894 = scmp.lt.s32.totalorder %s43, 1
        %s895 = scalar_select %p894, %s43, 1
        %s896 = scalar_lea.vmem %s8, %s895
        %p897 = scmp.lt.s32.totalorder %s43, 1
        %s898 = scalar_select %p897, %s43, 1
        %s899 = scalar_lea.vmem %s9, %s898
        %p900 = scmp.lt.s32.totalorder %s43, 1
        %s901 = scalar_select %p900, %s43, 1
        %s902 = smul.addr %s901, 4
        %s903 = smul.addr %s902, 4
        %s904 = scalar_lea.vmem %s10, %s903
        %p905 = scmp.lt.s32.totalorder %s43, 1
        %s906 = scalar_select %p905, %s43, 1
        %s907 = scalar_lea.vmem %s11, %s906
        %p908 = scmp.lt.s32.totalorder %s43, 1
        %s909 = scalar_select %p908, %s43, 1
        %s910 = scalar_lea.vmem %s12, %s909
        %p911 = scmp.lt.s32.totalorder %s43, 1
        %s912 = scalar_select %p911, %s43, 1
        %s913 = scalar_lea.vmem %s13, %s912
        %p914 = scmp.lt.s32.totalorder %s43, 1
        %s915 = scalar_select %p914, %s43, 1
        %s916 = smul.addr %s915, 4
        %s917 = smul.addr %s916, 4
        %s918 = scalar_lea.vmem %s14, %s917
        %p919 = scmp.lt.s32.totalorder %s43, 1
        %s920 = scalar_select %p919, %s43, 1
        %s921 = scalar_lea.vmem %s15, %s920
        %p922 = scmp.lt.s32.totalorder %s43, 1
        %s923 = scalar_select %p922, %s43, 1
        %s924 = smul.addr %s923, 16
        %s925 = smul.addr %s924, 4
        %s926 = scalar_lea.vmem %s16, %s925
        %p927 = scmp.lt.s32.totalorder %s43, 1
        %s928 = scalar_select %p927, %s43, 1
        %s929 = scalar_lea.vmem %s17, %s928
        %p931 = scmp.eq.s32.totalorder %s43, 0
        // Predicated region
        $region109: #{tpu_custom_call.1} parent=99 // pred_check
          %p932 = pneg %p931
        $region110: #{tpu_custom_call.1} parent=99 // pred_check_branch
          %934 = sbr.rel (%p932) target = $region112
        $region111: #{tpu_custom_call.1} parent=99 // pred_region
          %v935 = vld [vmem:[%s749] sm:$0xff]
          %v936 = vmul.f32 %v935, 5.656854
          %v937 = vld [vmem:[#allocation5] sm:$0xff]
          %v938 = vadd.f32 %v936, %v937
          %vm939 = vcmask 261120
          %940 = vst.msk [vmem:[%s869] sm:$0xff] %vm939, %v938
        $region112: #{tpu_custom_call.1} parent=99 // pred_fallthru
          _
        %v941 = vld [vmem:[%s869] sm:$0xff]
        %v942 = vld [vmem:[%s872] sm:$0x1]
        %v943 = vld [vmem:[%s875] sm:$0x1]
        %vm944 = vcmask 261120
        %v945 = vsel %vm944, %v941, 0.0
        %946 = vadd.xlane.f32.xlu0 %v945
        %v947 = vpop.xlane.xlu0 %946
        %v948 = vrcp.pop 32.0
        %v949 = vmul.f32 %v947, %v948
        %v950 = vsub.f32 %v941, %v949
        %v951 = vmul.f32 %v950, %v950
        %v952 = vsel %vm944, %v951, 0.0
        %953 = vadd.xlane.f32.xlu0 %v952
        %v954 = vpop.xlane.xlu0 %953
        %v955 = vmul.f32 %v954, %v948
        %v956 = vadd.f32 %v955, 1e-05
        %v957 = vrsqrt.pop %v956
        %v958 = vmul.f32 %v950, %v957
        %v960 = vlaneseq
        %v961 = vshrl.u32 %v960, 7
        %v962 = vsub.s32 0, %v961
        %v963 = vrot.slane %v942, %v962
        %v965 = vmul.f32 %v958, %v963
        %v967 = vlaneseq
        %v968 = vshrl.u32 %v967, 7
        %v969 = vsub.s32 0, %v968
        %v970 = vrot.slane %v943, %v969
        %v972 = vadd.f32 %v965, %v970
        %v973 = vpack.c.bf16 %v972, %v972
        %v974 = vld [vmem:[%s880] sm:$0xf]
        %v975 = vld [vmem:[%s880 + $0x4] sm:$0xf]
        %v976 = vld [vmem:[%s880 + $0x8] sm:$0xf]
        %v977 = vld [vmem:[%s880 + $0xc] sm:$0xf]
        %v978 = vld [vmem:[%s893] sm:$0x1]
        %v980 = vlaneseq
        %v981 = vshrl.u32 %v980, 7
        %v982 = vsub.s32 0, %v981
        %v983 = vrot.slane %v978, %v982
        %v989 = vunpack.c.l.b16 %v974
        %v990 = vunpack.c.l.b16 %v975
        %v991 = vunpack.c.l.b16 %v976
        %v992 = vunpack.c.l.b16 %v977
        %v993 = vpack.c.b16 %v990, %v989
        %v994 = vpack.c.b16 %v992, %v991
        %v998 = vsel %vm944, %v973, 0
        %1000 = vmatprep.subr.bf16.mxu0 0
        %1001 = vmatpush1.bf16.msra.mxu0 %v993
        %1002 = vmatprep.subr.bf16.mxu0 0
        %1003 = vmatpush1.bf16.msra.mxu0 %v994
        %1004 = vmatprep.subr.bf16.mxu0 0
        %1005 = vmatpush1.bf16.msra.mxu0 0
        %1006 = vmatprep.subr.bf16.mxu0 0
        %1007 = vmatpush1.bf16.msra.mxu0 0
        %1008 = vmatprep.subr.bf16.mxu0 0
        %1009 = vmatpush1.bf16.msra.mxu0 0
        %1010 = vmatprep.subr.bf16.mxu0 0
        %1011 = vmatpush1.bf16.msra.mxu0 0
        %1012 = vmatprep.subr.bf16.mxu0 0
        %1013 = vmatpush1.bf16.msra.mxu0 0
        %1014 = vmatprep.subr.bf16.mxu0 0
        %1015 = vmatpush1.bf16.msra.mxu0 0
        %1016 = vmatprep.subr.bf16.mxu0 0
        %1017 = vmatpush1.bf16.msra.mxu0 0
        %1018 = vmatprep.subr.bf16.mxu0 0
        %1019 = vmatpush1.bf16.msra.mxu0 0
        %1020 = vmatprep.subr.bf16.mxu0 0
        %1021 = vmatpush1.bf16.msra.mxu0 0
        %1022 = vmatprep.subr.bf16.mxu0 0
        %1023 = vmatpush1.bf16.msra.mxu0 0
        %1024 = vmatprep.subr.bf16.mxu0 0
        %1025 = vmatpush1.bf16.msra.mxu0 0
        %1026 = vmatprep.subr.bf16.mxu0 0
        %1027 = vmatpush1.bf16.msra.mxu0 0
        %1028 = vmatprep.subr.bf16.mxu0 0
        %1029 = vmatpush1.bf16.msra.mxu0 0
        %1030 = vmatprep.subr.bf16.mxu0 0
        %1031 = vmatpush1.bf16.msra.mxu0 0
        %1032 = vmatprep.mubr.bf16.mxu0 0
        %1033 = vmatmul.mubr.bf16.gmra.mrb[0].mxu0 %v998
        %v1034 = vpop.f32.mrb[0].mxu0
        %v1035 = vadd.f32 %v983, %v1034
        %v1036 = vpop.f32.mrb[0].mxu0
        %v1037 = vpop.f32.mrb[0].mxu0
        %v1038 = vpop.f32.mrb[0].mxu0
        %1039 = vdwg.mxu0
        %v1040 = vld [vmem:[%s885] sm:$0xf]
        %v1041 = vld [vmem:[%s885 + $0x4] sm:$0xf]
        %v1042 = vld [vmem:[%s885 + $0x8] sm:$0xf]
        %v1043 = vld [vmem:[%s885 + $0xc] sm:$0xf]
        %v1044 = vld [vmem:[%s896] sm:$0x1]
        %v1046 = vlaneseq
        %v1047 = vshrl.u32 %v1046, 7
        %v1048 = vsub.s32 0, %v1047
        %v1049 = vrot.slane %v1044, %v1048
        %v1055 = vunpack.c.l.b16 %v1040
        %v1056 = vunpack.c.l.b16 %v1041
        %v1057 = vunpack.c.l.b16 %v1042
        %v1058 = vunpack.c.l.b16 %v1043
        %v1059 = vpack.c.b16 %v1056, %v1055
        %v1060 = vpack.c.b16 %v1058, %v1057
        %1063 = vmatprep.subr.bf16.mxu0 0
        %1064 = vmatpush1.bf16.msra.mxu0 %v1059
        %1065 = vmatprep.subr.bf16.mxu0 0
        %1066 = vmatpush1.bf16.msra.mxu0 %v1060
        %1067 = vmatprep.subr.bf16.mxu0 0
        %1068 = vmatpush1.bf16.msra.mxu0 0
        %1069 = vmatprep.subr.bf16.mxu0 0
        %1070 = vmatpush1.bf16.msra.mxu0 0
        %1071 = vmatprep.subr.bf16.mxu0 0
        %1072 = vmatpush1.bf16.msra.mxu0 0
        %1073 = vmatprep.subr.bf16.mxu0 0
        %1074 = vmatpush1.bf16.msra.mxu0 0
        %1075 = vmatprep.subr.bf16.mxu0 0
        %1076 = vmatpush1.bf16.msra.mxu0 0
        %1077 = vmatprep.subr.bf16.mxu0 0
        %1078 = vmatpush1.bf16.msra.mxu0 0
        %1079 = vmatprep.subr.bf16.mxu0 0
        %1080 = vmatpush1.bf16.msra.mxu0 0
        %1081 = vmatprep.subr.bf16.mxu0 0
        %1082 = vmatpush1.bf16.msra.mxu0 0
        %1083 = vmatprep.subr.bf16.mxu0 0
        %1084 = vmatpush1.bf16.msra.mxu0 0
        %1085 = vmatprep.subr.bf16.mxu0 0
        %1086 = vmatpush1.bf16.msra.mxu0 0
        %1087 = vmatprep.subr.bf16.mxu0 0
        %1088 = vmatpush1.bf16.msra.mxu0 0
        %1089 = vmatprep.subr.bf16.mxu0 0
        %1090 = vmatpush1.bf16.msra.mxu0 0
        %1091 = vmatprep.subr.bf16.mxu0 0
        %1092 = vmatpush1.bf16.msra.mxu0 0
        %1093 = vmatprep.subr.bf16.mxu0 0
        %1094 = vmatpush1.bf16.msra.mxu0 0
        %1095 = vmatprep.mubr.bf16.mxu0 0
        %1096 = vmatmul.mubr.bf16.gmra.mrb[0].mxu0 %v998
        %v1097 = vpop.f32.mrb[0].mxu0
        %v1098 = vadd.f32 %v1049, %v1097
        %v1099 = vpop.f32.mrb[0].mxu0
        %v1100 = vpop.f32.mrb[0].mxu0
        %v1101 = vpop.f32.mrb[0].mxu0
        %1102 = vdwg.mxu0
        %v1103 = vld [vmem:[%s890] sm:$0xf]
        %v1104 = vld [vmem:[%s890 + $0x4] sm:$0xf]
        %v1105 = vld [vmem:[%s890 + $0x8] sm:$0xf]
        %v1106 = vld [vmem:[%s890 + $0xc] sm:$0xf]
        %v1107 = vld [vmem:[%s899] sm:$0x1]
        %v1109 = vlaneseq
        %v1110 = vshrl.u32 %v1109, 7
        %v1111 = vsub.s32 0, %v1110
        %v1112 = vrot.slane %v1107, %v1111
        %v1118 = vunpack.c.l.b16 %v1103
        %v1119 = vunpack.c.l.b16 %v1104
        %v1120 = vunpack.c.l.b16 %v1105
        %v1121 = vunpack.c.l.b16 %v1106
        %v1122 = vpack.c.b16 %v1119, %v1118
        %v1123 = vpack.c.b16 %v1121, %v1120
        %1126 = vmatprep.subr.bf16.mxu0 0
        %1127 = vmatpush1.bf16.msra.mxu0 %v1122
        %1128 = vmatprep.subr.bf16.mxu0 0
        %1129 = vmatpush1.bf16.msra.mxu0 %v1123
        %1130 = vmatprep.subr.bf16.mxu0 0
        %1131 = vmatpush1.bf16.msra.mxu0 0
        %1132 = vmatprep.subr.bf16.mxu0 0
        %1133 = vmatpush1.bf16.msra.mxu0 0
        %1134 = vmatprep.subr.bf16.mxu0 0
        %1135 = vmatpush1.bf16.msra.mxu0 0
        %1136 = vmatprep.subr.bf16.mxu0 0
        %1137 = vmatpush1.bf16.msra.mxu0 0
        %1138 = vmatprep.subr.bf16.mxu0 0
        %1139 = vmatpush1.bf16.msra.mxu0 0
        %1140 = vmatprep.subr.bf16.mxu0 0
        %1141 = vmatpush1.bf16.msra.mxu0 0
        %1142 = vmatprep.subr.bf16.mxu0 0
        %1143 = vmatpush1.bf16.msra.mxu0 0
        %1144 = vmatprep.subr.bf16.mxu0 0
        %1145 = vmatpush1.bf16.msra.mxu0 0
        %1146 = vmatprep.subr.bf16.mxu0 0
        %1147 = vmatpush1.bf16.msra.mxu0 0
        %1148 = vmatprep.subr.bf16.mxu0 0
        %1149 = vmatpush1.bf16.msra.mxu0 0
        %1150 = vmatprep.subr.bf16.mxu0 0
        %1151 = vmatpush1.bf16.msra.mxu0 0
        %1152 = vmatprep.subr.bf16.mxu0 0
        %1153 = vmatpush1.bf16.msra.mxu0 0
        %1154 = vmatprep.subr.bf16.mxu0 0
        %1155 = vmatpush1.bf16.msra.mxu0 0
        %1156 = vmatprep.subr.bf16.mxu0 0
        %1157 = vmatpush1.bf16.msra.mxu0 0
        %1158 = vmatprep.mubr.bf16.mxu0 0
        %1159 = vmatmul.mubr.bf16.gmra.mrb[0].mxu0 %v998
        %v1160 = vpop.f32.mrb[0].mxu0
        %v1161 = vadd.f32 %v1112, %v1160
        %v1162 = vpop.f32.mrb[0].mxu0
        %v1163 = vpop.f32.mrb[0].mxu0
        %v1164 = vpop.f32.mrb[0].mxu0
        %1165 = vdwg.mxu0
        %vm1166 = vcmask 64512
        %v1168 = vsel %vm1166, %v1035, 0
        %v1171 = vsel %vm1166, %v1098, 0
        %1173 = vmatprep.subr.mxu0 0.0
        %1174 = vmatpush1.xpose.msra.mxu0 %v1171
        %1175 = vmatprep.subr.mxu0 0.0
        %1176 = vmatpush1.xpose.msra.mxu0 0.0
        %1177 = vmatprep.subr.mxu0 0.0
        %1178 = vmatpush1.xpose.msra.mxu0 0.0
        %1179 = vmatprep.subr.mxu0 0.0
        %1180 = vmatpush1.xpose.msra.mxu0 0.0
        %1181 = vmatprep.subr.mxu0 0.0
        %1182 = vmatpush1.xpose.msra.mxu0 0.0
        %1183 = vmatprep.subr.mxu0 0.0
        %1184 = vmatpush1.xpose.msra.mxu0 0.0
        %1185 = vmatprep.subr.mxu0 0.0
        %1186 = vmatpush1.xpose.msra.mxu0 0.0
        %1187 = vmatprep.subr.mxu0 0.0
        %1188 = vmatpush1.xpose.msra.mxu0 0.0
        %1189 = vmatprep.subr.mxu0 0.0
        %1190 = vmatpush1.xpose.msra.mxu0 0.0
        %1191 = vmatprep.subr.mxu0 0.0
        %1192 = vmatpush1.xpose.msra.mxu0 0.0
        %1193 = vmatprep.subr.mxu0 0.0
        %1194 = vmatpush1.xpose.msra.mxu0 0.0
        %1195 = vmatprep.subr.mxu0 0.0
        %1196 = vmatpush1.xpose.msra.mxu0 0.0
        %1197 = vmatprep.subr.mxu0 0.0
        %1198 = vmatpush1.xpose.msra.mxu0 0.0
        %1199 = vmatprep.subr.mxu0 0.0
        %1200 = vmatpush1.xpose.msra.mxu0 0.0
        %1201 = vmatprep.subr.mxu0 0.0
        %1202 = vmatpush1.xpose.msra.mxu0 0.0
        %1203 = vmatprep.subr.mxu0 0.0
        %1204 = vmatpush1.xpose.msra.mxu0 0.0
        %1205 = vmatprep.subr.mxu0 0.0
        %1206 = vmatpush1.xpose.msra.mxu0 0.0
        %1207 = vmatprep.subr.mxu0 0.0
        %1208 = vmatpush1.xpose.msra.mxu0 0.0
        %1209 = vmatprep.subr.mxu0 0.0
        %1210 = vmatpush1.xpose.msra.mxu0 0.0
        %1211 = vmatprep.subr.mxu0 0.0
        %1212 = vmatpush1.xpose.msra.mxu0 0.0
        %1213 = vmatprep.subr.mxu0 0.0
        %1214 = vmatpush1.xpose.msra.mxu0 0.0
        %1215 = vmatprep.subr.mxu0 0.0
        %1216 = vmatpush1.xpose.msra.mxu0 0.0
        %1217 = vmatprep.subr.mxu0 0.0
        %1218 = vmatpush1.xpose.msra.mxu0 0.0
        %1219 = vmatprep.subr.mxu0 0.0
        %1220 = vmatpush1.xpose.msra.mxu0 0.0
        %1221 = vmatprep.subr.mxu0 0.0
        %1222 = vmatpush1.xpose.msra.mxu0 0.0
        %1223 = vmatprep.subr.mxu0 0.0
        %1224 = vmatpush1.xpose.msra.mxu0 0.0
        %1225 = vmatprep.subr.mxu0 0.0
        %1226 = vmatpush1.xpose.msra.mxu0 0.0
        %1227 = vmatprep.subr.mxu0 0.0
        %1228 = vmatpush1.xpose.msra.mxu0 0.0
        %1229 = vmatprep.subr.mxu0 0.0
        %1230 = vmatpush1.xpose.msra.mxu0 0.0
        %1231 = vmatprep.subr.mxu0 0.0
        %1232 = vmatpush1.xpose.msra.mxu0 0.0
        %1233 = vmatprep.subr.mxu0 0.0
        %1234 = vmatpush1.xpose.msra.mxu0 0.0
        %1235 = vmatprep.subr.mxu0 0.0
        %1236 = vmatpush1.xpose.msra.mxu0 0.0
        %1237 = vmatprep.mubr.f32.mxu0 0.0
        %1238 = vmatmul.mubr.f32.gmra.mrb[0].mxu0 %v1168
        %v1239 = vpop.f32.mrb[0].mxu0
        %v1240 = vadd.f32 0.0, %v1239
        %v1241 = vpop.f32.mrb[0].mxu0
        %1242 = vdwg.mxu0
        %v1243 = vsel %vm1166, %v1240, -inf
        %1244 = vmax.xlane.f32.xlu0 %v1243
        %v1245 = vpop.xlane.xlu0 %1244
        %v1246 = vsub.f32 %v1240, %v1245
        %v1247 = vmul.f32 %v1246, 1.442695
        %v1248 = vpow.pop %v1247
        %v1249 = vsel %vm1166, %v1248, 0.0
        %1250 = vadd.xlane.f32.xlu0 %v1249
        %v1251 = vpop.xlane.xlu0 %1250
        %v1252 = vrcp.pop %v1251
        %v1253 = vmul.f32 %v1248, %v1252
        %v1255 = vsel %vm1166, %v1253, 0
        %1257 = vmatprep.subr.mxu0 0.0
        %1258 = vmatpush1.msra.mxu0 %v1161
        %1259 = vmatprep.subr.mxu0 0.0
        %1260 = vmatpush1.msra.mxu0 0.0
        %1261 = vmatprep.subr.mxu0 0.0
        %1262 = vmatpush1.msra.mxu0 0.0
        %1263 = vmatprep.subr.mxu0 0.0
        %1264 = vmatpush1.msra.mxu0 0.0
        %1265 = vmatprep.subr.mxu0 0.0
        %1266 = vmatpush1.msra.mxu0 0.0
        %1267 = vmatprep.subr.mxu0 0.0
        %1268 = vmatpush1.msra.mxu0 0.0
        %1269 = vmatprep.subr.mxu0 0.0
        %1270 = vmatpush1.msra.mxu0 0.0
        %1271 = vmatprep.subr.mxu0 0.0
        %1272 = vmatpush1.msra.mxu0 0.0
        %1273 = vmatprep.subr.mxu0 0.0
        %1274 = vmatpush1.msra.mxu0 0.0
        %1275 = vmatprep.subr.mxu0 0.0
        %1276 = vmatpush1.msra.mxu0 0.0
        %1277 = vmatprep.subr.mxu0 0.0
        %1278 = vmatpush1.msra.mxu0 0.0
        %1279 = vmatprep.subr.mxu0 0.0
        %1280 = vmatpush1.msra.mxu0 0.0
        %1281 = vmatprep.subr.mxu0 0.0
        %1282 = vmatpush1.msra.mxu0 0.0
        %1283 = vmatprep.subr.mxu0 0.0
        %1284 = vmatpush1.msra.mxu0 0.0
        %1285 = vmatprep.subr.mxu0 0.0
        %1286 = vmatpush1.msra.mxu0 0.0
        %1287 = vmatprep.subr.mxu0 0.0
        %1288 = vmatpush1.msra.mxu0 0.0
        %1289 = vmatprep.subr.mxu0 0.0
        %1290 = vmatpush1.msra.mxu0 0.0
        %1291 = vmatprep.subr.mxu0 0.0
        %1292 = vmatpush1.msra.mxu0 0.0
        %1293 = vmatprep.subr.mxu0 0.0
        %1294 = vmatpush1.msra.mxu0 0.0
        %1295 = vmatprep.subr.mxu0 0.0
        %1296 = vmatpush1.msra.mxu0 0.0
        %1297 = vmatprep.subr.mxu0 0.0
        %1298 = vmatpush1.msra.mxu0 0.0
        %1299 = vmatprep.subr.mxu0 0.0
        %1300 = vmatpush1.msra.mxu0 0.0
        %1301 = vmatprep.subr.mxu0 0.0
        %1302 = vmatpush1.msra.mxu0 0.0
        %1303 = vmatprep.subr.mxu0 0.0
        %1304 = vmatpush1.msra.mxu0 0.0
        %1305 = vmatprep.subr.mxu0 0.0
        %1306 = vmatpush1.msra.mxu0 0.0
        %1307 = vmatprep.subr.mxu0 0.0
        %1308 = vmatpush1.msra.mxu0 0.0
        %1309 = vmatprep.subr.mxu0 0.0
        %1310 = vmatpush1.msra.mxu0 0.0
        %1311 = vmatprep.subr.mxu0 0.0
        %1312 = vmatpush1.msra.mxu0 0.0
        %1313 = vmatprep.subr.mxu0 0.0
        %1314 = vmatpush1.msra.mxu0 0.0
        %1315 = vmatprep.subr.mxu0 0.0
        %1316 = vmatpush1.msra.mxu0 0.0
        %1317 = vmatprep.subr.mxu0 0.0
        %1318 = vmatpush1.msra.mxu0 0.0
        %1319 = vmatprep.subr.mxu0 0.0
        %1320 = vmatpush1.msra.mxu0 0.0
        %1321 = vmatprep.mubr.f32.mxu0 0.0
        %1322 = vmatmul.mubr.f32.gmra.mrb[0].mxu0 %v1255
        %v1323 = vpop.f32.mrb[0].mxu0
        %v1324 = vadd.f32 0.0, %v1323
        %v1325 = vpop.f32.mrb[0].mxu0
        %1326 = vdwg.mxu0
        %v1327 = vpack.c.bf16 %v1324, %v1324
        %v1328 = vld [vmem:[%s904] sm:$0xf]
        %1329 = vrot.lane.b32.xlu0 %v1035, 120
        %v1330 = vpop.permute.xlu0 %1329
        %1331 = vrot.lane.b32.xlu0 %v1098, 120
        %v1332 = vpop.permute.xlu0 %1331
        %v1333 = vsel %vm1166, %v1330, 0
        %v1335 = vsel %vm1166, %v1332, 0
        %1337 = vmatprep.subr.mxu0 0.0
        %1338 = vmatpush1.xpose.msra.mxu0 %v1335
        %1339 = vmatprep.subr.mxu0 0.0
        %1340 = vmatpush1.xpose.msra.mxu0 0.0
        %1341 = vmatprep.subr.mxu0 0.0
        %1342 = vmatpush1.xpose.msra.mxu0 0.0
        %1343 = vmatprep.subr.mxu0 0.0
        %1344 = vmatpush1.xpose.msra.mxu0 0.0
        %1345 = vmatprep.subr.mxu0 0.0
        %1346 = vmatpush1.xpose.msra.mxu0 0.0
        %1347 = vmatprep.subr.mxu0 0.0
        %1348 = vmatpush1.xpose.msra.mxu0 0.0
        %1349 = vmatprep.subr.mxu0 0.0
        %1350 = vmatpush1.xpose.msra.mxu0 0.0
        %1351 = vmatprep.subr.mxu0 0.0
        %1352 = vmatpush1.xpose.msra.mxu0 0.0
        %1353 = vmatprep.subr.mxu0 0.0
        %1354 = vmatpush1.xpose.msra.mxu0 0.0
        %1355 = vmatprep.subr.mxu0 0.0
        %1356 = vmatpush1.xpose.msra.mxu0 0.0
        %1357 = vmatprep.subr.mxu0 0.0
        %1358 = vmatpush1.xpose.msra.mxu0 0.0
        %1359 = vmatprep.subr.mxu0 0.0
        %1360 = vmatpush1.xpose.msra.mxu0 0.0
        %1361 = vmatprep.subr.mxu0 0.0
        %1362 = vmatpush1.xpose.msra.mxu0 0.0
        %1363 = vmatprep.subr.mxu0 0.0
        %1364 = vmatpush1.xpose.msra.mxu0 0.0
        %1365 = vmatprep.subr.mxu0 0.0
        %1366 = vmatpush1.xpose.msra.mxu0 0.0
        %1367 = vmatprep.subr.mxu0 0.0
        %1368 = vmatpush1.xpose.msra.mxu0 0.0
        %1369 = vmatprep.subr.mxu0 0.0
        %1370 = vmatpush1.xpose.msra.mxu0 0.0
        %1371 = vmatprep.subr.mxu0 0.0
        %1372 = vmatpush1.xpose.msra.mxu0 0.0
        %1373 = vmatprep.subr.mxu0 0.0
        %1374 = vmatpush1.xpose.msra.mxu0 0.0
        %1375 = vmatprep.subr.mxu0 0.0
        %1376 = vmatpush1.xpose.msra.mxu0 0.0
        %1377 = vmatprep.subr.mxu0 0.0
        %1378 = vmatpush1.xpose.msra.mxu0 0.0
        %1379 = vmatprep.subr.mxu0 0.0
        %1380 = vmatpush1.xpose.msra.mxu0 0.0
        %1381 = vmatprep.subr.mxu0 0.0
        %1382 = vmatpush1.xpose.msra.mxu0 0.0
        %1383 = vmatprep.subr.mxu0 0.0
        %1384 = vmatpush1.xpose.msra.mxu0 0.0
        %1385 = vmatprep.subr.mxu0 0.0
        %1386 = vmatpush1.xpose.msra.mxu0 0.0
        %1387 = vmatprep.subr.mxu0 0.0
        %1388 = vmatpush1.xpose.msra.mxu0 0.0
        %1389 = vmatprep.subr.mxu0 0.0
        %1390 = vmatpush1.xpose.msra.mxu0 0.0
        %1391 = vmatprep.subr.mxu0 0.0
        %1392 = vmatpush1.xpose.msra.mxu0 0.0
        %1393 = vmatprep.subr.mxu0 0.0
        %1394 = vmatpush1.xpose.msra.mxu0 0.0
        %1395 = vmatprep.subr.mxu0 0.0
        %1396 = vmatpush1.xpose.msra.mxu0 0.0
        %1397 = vmatprep.subr.mxu0 0.0
        %1398 = vmatpush1.xpose.msra.mxu0 0.0
        %1399 = vmatprep.subr.mxu0 0.0
        %1400 = vmatpush1.xpose.msra.mxu0 0.0
        %1401 = vmatprep.mubr.f32.mxu0 0.0
        %1402 = vmatmul.mubr.f32.gmra.mrb[0].mxu0 %v1333
        %v1403 = vpop.f32.mrb[0].mxu0
        %v1404 = vadd.f32 0.0, %v1403
        %v1405 = vpop.f32.mrb[0].mxu0
        %1406 = vdwg.mxu0
        %v1407 = vsel %vm1166, %v1404, -inf
        %1408 = vmax.xlane.f32.xlu0 %v1407
        %v1409 = vpop.xlane.xlu0 %1408
        %v1410 = vsub.f32 %v1404, %v1409
        %v1411 = vmul.f32 %v1410, 1.442695
        %v1412 = vpow.pop %v1411
        %v1413 = vsel %vm1166, %v1412, 0.0
        %1414 = vadd.xlane.f32.xlu0 %v1413
        %v1415 = vpop.xlane.xlu0 %1414
        %v1416 = vrcp.pop %v1415
        %v1417 = vmul.f32 %v1412, %v1416
        %1419 = vrot.lane.b32.xlu0 %v1161, 120
        %v1420 = vpop.permute.xlu0 %1419
        %v1423 = vsel %vm1166, %v1417, 0
        %1425 = vmatprep.subr.mxu0 0.0
        %1426 = vmatpush1.msra.mxu0 %v1420
        %1427 = vmatprep.subr.mxu0 0.0
        %1428 = vmatpush1.msra.mxu0 0.0
        %1429 = vmatprep.subr.mxu0 0.0
        %1430 = vmatpush1.msra.mxu0 0.0
        %1431 = vmatprep.subr.mxu0 0.0
        %1432 = vmatpush1.msra.mxu0 0.0
        %1433 = vmatprep.subr.mxu0 0.0
        %1434 = vmatpush1.msra.mxu0 0.0
        %1435 = vmatprep.subr.mxu0 0.0
        %1436 = vmatpush1.msra.mxu0 0.0
        %1437 = vmatprep.subr.mxu0 0.0
        %1438 = vmatpush1.msra.mxu0 0.0
        %1439 = vmatprep.subr.mxu0 0.0
        %1440 = vmatpush1.msra.mxu0 0.0
        %1441 = vmatprep.subr.mxu0 0.0
        %1442 = vmatpush1.msra.mxu0 0.0
        %1443 = vmatprep.subr.mxu0 0.0
        %1444 = vmatpush1.msra.mxu0 0.0
        %1445 = vmatprep.subr.mxu0 0.0
        %1446 = vmatpush1.msra.mxu0 0.0
        %1447 = vmatprep.subr.mxu0 0.0
        %1448 = vmatpush1.msra.mxu0 0.0
        %1449 = vmatprep.subr.mxu0 0.0
        %1450 = vmatpush1.msra.mxu0 0.0
        %1451 = vmatprep.subr.mxu0 0.0
        %1452 = vmatpush1.msra.mxu0 0.0
        %1453 = vmatprep.subr.mxu0 0.0
        %1454 = vmatpush1.msra.mxu0 0.0
        %1455 = vmatprep.subr.mxu0 0.0
        %1456 = vmatpush1.msra.mxu0 0.0
        %1457 = vmatprep.subr.mxu0 0.0
        %1458 = vmatpush1.msra.mxu0 0.0
        %1459 = vmatprep.subr.mxu0 0.0
        %1460 = vmatpush1.msra.mxu0 0.0
        %1461 = vmatprep.subr.mxu0 0.0
        %1462 = vmatpush1.msra.mxu0 0.0
        %1463 = vmatprep.subr.mxu0 0.0
        %1464 = vmatpush1.msra.mxu0 0.0
        %1465 = vmatprep.subr.mxu0 0.0
        %1466 = vmatpush1.msra.mxu0 0.0
        %1467 = vmatprep.subr.mxu0 0.0
        %1468 = vmatpush1.msra.mxu0 0.0
        %1469 = vmatprep.subr.mxu0 0.0
        %1470 = vmatpush1.msra.mxu0 0.0
        %1471 = vmatprep.subr.mxu0 0.0
        %1472 = vmatpush1.msra.mxu0 0.0
        %1473 = vmatprep.subr.mxu0 0.0
        %1474 = vmatpush1.msra.mxu0 0.0
        %1475 = vmatprep.subr.mxu0 0.0
        %1476 = vmatpush1.msra.mxu0 0.0
        %1477 = vmatprep.subr.mxu0 0.0
        %1478 = vmatpush1.msra.mxu0 0.0
        %1479 = vmatprep.subr.mxu0 0.0
        %1480 = vmatpush1.msra.mxu0 0.0
        %1481 = vmatprep.subr.mxu0 0.0
        %1482 = vmatpush1.msra.mxu0 0.0
        %1483 = vmatprep.subr.mxu0 0.0
        %1484 = vmatpush1.msra.mxu0 0.0
        %1485 = vmatprep.subr.mxu0 0.0
        %1486 = vmatpush1.msra.mxu0 0.0
        %1487 = vmatprep.subr.mxu0 0.0
        %1488 = vmatpush1.msra.mxu0 0.0
        %1489 = vmatprep.mubr.f32.mxu0 0.0
        %1490 = vmatmul.mubr.f32.gmra.mrb[0].mxu0 %v1423
        %v1491 = vpop.f32.mrb[0].mxu0
        %v1492 = vadd.f32 0.0, %v1491
        %v1493 = vpop.f32.mrb[0].mxu0
        %1494 = vdwg.mxu0
        %v1495 = vpack.c.bf16 %v1492, %v1492
        %s1496 = scalar_lea.vmem %s904, 4
        %v1497 = vld [vmem:[%s1496] sm:$0xf]
        %v1499 = vsel %vm1166, %v1495, 0
        %vm1501 = vcmask 1043456
        %v1503 = vsel %vm1501, %v1497, 0
        %1505 = vmatprep.subr.bf16.mxu0 0
        %1506 = vmatpush1.bf16.msra.mxu0 %v1503
        %1507 = vmatprep.subr.bf16.mxu0 0
        %1508 = vmatpush1.bf16.msra.mxu0 0
        %1509 = vmatprep.subr.bf16.mxu0 0
        %1510 = vmatpush1.bf16.msra.mxu0 0
        %1511 = vmatprep.subr.bf16.mxu0 0
        %1512 = vmatpush1.bf16.msra.mxu0 0
        %1513 = vmatprep.subr.bf16.mxu0 0
        %1514 = vmatpush1.bf16.msra.mxu0 0
        %1515 = vmatprep.subr.bf16.mxu0 0
        %1516 = vmatpush1.bf16.msra.mxu0 0
        %1517 = vmatprep.subr.bf16.mxu0 0
        %1518 = vmatpush1.bf16.msra.mxu0 0
        %1519 = vmatprep.subr.bf16.mxu0 0
        %1520 = vmatpush1.bf16.msra.mxu0 0
        %1521 = vmatprep.subr.bf16.mxu0 0
        %1522 = vmatpush1.bf16.msra.mxu0 0
        %1523 = vmatprep.subr.bf16.mxu0 0
        %1524 = vmatpush1.bf16.msra.mxu0 0
        %1525 = vmatprep.subr.bf16.mxu0 0
        %1526 = vmatpush1.bf16.msra.mxu0 0
        %1527 = vmatprep.subr.bf16.mxu0 0
        %1528 = vmatpush1.bf16.msra.mxu0 0
        %1529 = vmatprep.subr.bf16.mxu0 0
        %1530 = vmatpush1.bf16.msra.mxu0 0
        %1531 = vmatprep.subr.bf16.mxu0 0
        %1532 = vmatpush1.bf16.msra.mxu0 0
        %1533 = vmatprep.subr.bf16.mxu0 0
        %1534 = vmatpush1.bf16.msra.mxu0 0
        %1535 = vmatprep.subr.bf16.mxu0 0
        %1536 = vmatpush1.bf16.msra.mxu0 0
        %1537 = vmatprep.mubr.bf16.mxu0 0
        %1538 = vmatmul.mubr.bf16.gmra.mrb[0].mxu0 %v1499
        %v1539 = vpop.f32.mrb[0].mxu0
        %v1540 = vadd.f32 0.0, %v1539
        %v1541 = vpop.f32.mrb[0].mxu0
        %v1542 = vpop.f32.mrb[0].mxu0
        %v1543 = vpop.f32.mrb[0].mxu0
        %1544 = vdwg.mxu0
        %v1546 = vsel %vm1166, %v1327, 0
        %v1549 = vsel %vm1501, %v1328, 0
        %1551 = vmatprep.subr.bf16.mxu0 0
        %1552 = vmatpush1.bf16.msra.mxu0 %v1549
        %1553 = vmatprep.subr.bf16.mxu0 0
        %1554 = vmatpush1.bf16.msra.mxu0 0
        %1555 = vmatprep.subr.bf16.mxu0 0
        %1556 = vmatpush1.bf16.msra.mxu0 0
        %1557 = vmatprep.subr.bf16.mxu0 0
        %1558 = vmatpush1.bf16.msra.mxu0 0
        %1559 = vmatprep.subr.bf16.mxu0 0
        %1560 = vmatpush1.bf16.msra.mxu0 0
        %1561 = vmatprep.subr.bf16.mxu0 0
        %1562 = vmatpush1.bf16.msra.mxu0 0
        %1563 = vmatprep.subr.bf16.mxu0 0
        %1564 = vmatpush1.bf16.msra.mxu0 0
        %1565 = vmatprep.subr.bf16.mxu0 0
        %1566 = vmatpush1.bf16.msra.mxu0 0
        %1567 = vmatprep.subr.bf16.mxu0 0
        %1568 = vmatpush1.bf16.msra.mxu0 0
        %1569 = vmatprep.subr.bf16.mxu0 0
        %1570 = vmatpush1.bf16.msra.mxu0 0
        %1571 = vmatprep.subr.bf16.mxu0 0
        %1572 = vmatpush1.bf16.msra.mxu0 0
        %1573 = vmatprep.subr.bf16.mxu0 0
        %1574 = vmatpush1.bf16.msra.mxu0 0
        %1575 = vmatprep.subr.bf16.mxu0 0
        %1576 = vmatpush1.bf16.msra.mxu0 0
        %1577 = vmatprep.subr.bf16.mxu0 0
        %1578 = vmatpush1.bf16.msra.mxu0 0
        %1579 = vmatprep.subr.bf16.mxu0 0
        %1580 = vmatpush1.bf16.msra.mxu0 0
        %1581 = vmatprep.subr.bf16.mxu0 0
        %1582 = vmatpush1.bf16.msra.mxu0 0
        %1583 = vmatprep.mubr.bf16.mxu0 0
        %1584 = vmatmul.mubr.bf16.gmra.mrb[0].mxu0 %v1546
        %v1585 = vpop.f32.mrb[0].mxu0
        %v1586 = vadd.f32 %v1540, %v1585
        %v1587 = vpop.f32.mrb[0].mxu0
        %v1588 = vpop.f32.mrb[0].mxu0
        %v1589 = vpop.f32.mrb[0].mxu0
        %1590 = vdwg.mxu0
        %1591 = vrot.lane.b32.xlu0 %v1035, 112
        %v1592 = vpop.permute.xlu0 %1591
        %1593 = vrot.lane.b32.xlu0 %v1098, 112
        %v1594 = vpop.permute.xlu0 %1593
        %v1595 = vsel %vm1166, %v1592, 0
        %v1597 = vsel %vm1166, %v1594, 0
        %1599 = vmatprep.subr.mxu0 0.0
        %1600 = vmatpush1.xpose.msra.mxu0 %v1597
        %1601 = vmatprep.subr.mxu0 0.0
        %1602 = vmatpush1.xpose.msra.mxu0 0.0
        %1603 = vmatprep.subr.mxu0 0.0
        %1604 = vmatpush1.xpose.msra.mxu0 0.0
        %1605 = vmatprep.subr.mxu0 0.0
        %1606 = vmatpush1.xpose.msra.mxu0 0.0
        %1607 = vmatprep.subr.mxu0 0.0
        %1608 = vmatpush1.xpose.msra.mxu0 0.0
        %1609 = vmatprep.subr.mxu0 0.0
        %1610 = vmatpush1.xpose.msra.mxu0 0.0
        %1611 = vmatprep.subr.mxu0 0.0
        %1612 = vmatpush1.xpose.msra.mxu0 0.0
        %1613 = vmatprep.subr.mxu0 0.0
        %1614 = vmatpush1.xpose.msra.mxu0 0.0
        %1615 = vmatprep.subr.mxu0 0.0
        %1616 = vmatpush1.xpose.msra.mxu0 0.0
        %1617 = vmatprep.subr.mxu0 0.0
        %1618 = vmatpush1.xpose.msra.mxu0 0.0
        %1619 = vmatprep.subr.mxu0 0.0
        %1620 = vmatpush1.xpose.msra.mxu0 0.0
        %1621 = vmatprep.subr.mxu0 0.0
        %1622 = vmatpush1.xpose.msra.mxu0 0.0
        %1623 = vmatprep.subr.mxu0 0.0
        %1624 = vmatpush1.xpose.msra.mxu0 0.0
        %1625 = vmatprep.subr.mxu0 0.0
        %1626 = vmatpush1.xpose.msra.mxu0 0.0
        %1627 = vmatprep.subr.mxu0 0.0
        %1628 = vmatpush1.xpose.msra.mxu0 0.0
        %1629 = vmatprep.subr.mxu0 0.0
        %1630 = vmatpush1.xpose.msra.mxu0 0.0
        %1631 = vmatprep.subr.mxu0 0.0
        %1632 = vmatpush1.xpose.msra.mxu0 0.0
        %1633 = vmatprep.subr.mxu0 0.0
        %1634 = vmatpush1.xpose.msra.mxu0 0.0
        %1635 = vmatprep.subr.mxu0 0.0
        %1636 = vmatpush1.xpose.msra.mxu0 0.0
        %1637 = vmatprep.subr.mxu0 0.0
        %1638 = vmatpush1.xpose.msra.mxu0 0.0
        %1639 = vmatprep.subr.mxu0 0.0
        %1640 = vmatpush1.xpose.msra.mxu0 0.0
        %1641 = vmatprep.subr.mxu0 0.0
        %1642 = vmatpush1.xpose.msra.mxu0 0.0
        %1643 = vmatprep.subr.mxu0 0.0
        %1644 = vmatpush1.xpose.msra.mxu0 0.0
        %1645 = vmatprep.subr.mxu0 0.0
        %1646 = vmatpush1.xpose.msra.mxu0 0.0
        %1647 = vmatprep.subr.mxu0 0.0
        %1648 = vmatpush1.xpose.msra.mxu0 0.0
        %1649 = vmatprep.subr.mxu0 0.0
        %1650 = vmatpush1.xpose.msra.mxu0 0.0
        %1651 = vmatprep.subr.mxu0 0.0
        %1652 = vmatpush1.xpose.msra.mxu0 0.0
        %1653 = vmatprep.subr.mxu0 0.0
        %1654 = vmatpush1.xpose.msra.mxu0 0.0
        %1655 = vmatprep.subr.mxu0 0.0
        %1656 = vmatpush1.xpose.msra.mxu0 0.0
        %1657 = vmatprep.subr.mxu0 0.0
        %1658 = vmatpush1.xpose.msra.mxu0 0.0
        %1659 = vmatprep.subr.mxu0 0.0
        %1660 = vmatpush1.xpose.msra.mxu0 0.0
        %1661 = vmatprep.subr.mxu0 0.0
        %1662 = vmatpush1.xpose.msra.mxu0 0.0
        %1663 = vmatprep.mubr.f32.mxu0 0.0
        %1664 = vmatmul.mubr.f32.gmra.mrb[0].mxu0 %v1595
        %v1665 = vpop.f32.mrb[0].mxu0
        %v1666 = vadd.f32 0.0, %v1665
        %v1667 = vpop.f32.mrb[0].mxu0
        %1668 = vdwg.mxu0
        %v1669 = vsel %vm1166, %v1666, -inf
        %1670 = vmax.xlane.f32.xlu0 %v1669
        %v1671 = vpop.xlane.xlu0 %1670
        %v1672 = vsub.f32 %v1666, %v1671
        %v1673 = vmul.f32 %v1672, 1.442695
        %v1674 = vpow.pop %v1673
        %v1675 = vsel %vm1166, %v1674, 0.0
        %1676 = vadd.xlane.f32.xlu0 %v1675
        %v1677 = vpop.xlane.xlu0 %1676
        %v1678 = vrcp.pop %v1677
        %v1679 = vmul.f32 %v1674, %v1678
        %1680 = vrot.lane.b32.xlu0 %v1161, 112
        %v1681 = vpop.permute.xlu0 %1680
        %v1684 = vsel %vm1166, %v1679, 0
        %1686 = vmatprep.subr.mxu0 0.0
        %1687 = vmatpush1.msra.mxu0 %v1681
        %1688 = vmatprep.subr.mxu0 0.0
        %1689 = vmatpush1.msra.mxu0 0.0
        %1690 = vmatprep.subr.mxu0 0.0
        %1691 = vmatpush1.msra.mxu0 0.0
        %1692 = vmatprep.subr.mxu0 0.0
        %1693 = vmatpush1.msra.mxu0 0.0
        %1694 = vmatprep.subr.mxu0 0.0
        %1695 = vmatpush1.msra.mxu0 0.0
        %1696 = vmatprep.subr.mxu0 0.0
        %1697 = vmatpush1.msra.mxu0 0.0
        %1698 = vmatprep.subr.mxu0 0.0
        %1699 = vmatpush1.msra.mxu0 0.0
        %1700 = vmatprep.subr.mxu0 0.0
        %1701 = vmatpush1.msra.mxu0 0.0
        %1702 = vmatprep.subr.mxu0 0.0
        %1703 = vmatpush1.msra.mxu0 0.0
        %1704 = vmatprep.subr.mxu0 0.0
        %1705 = vmatpush1.msra.mxu0 0.0
        %1706 = vmatprep.subr.mxu0 0.0
        %1707 = vmatpush1.msra.mxu0 0.0
        %1708 = vmatprep.subr.mxu0 0.0
        %1709 = vmatpush1.msra.mxu0 0.0
        %1710 = vmatprep.subr.mxu0 0.0
        %1711 = vmatpush1.msra.mxu0 0.0
        %1712 = vmatprep.subr.mxu0 0.0
        %1713 = vmatpush1.msra.mxu0 0.0
        %1714 = vmatprep.subr.mxu0 0.0
        %1715 = vmatpush1.msra.mxu0 0.0
        %1716 = vmatprep.subr.mxu0 0.0
        %1717 = vmatpush1.msra.mxu0 0.0
        %1718 = vmatprep.subr.mxu0 0.0
        %1719 = vmatpush1.msra.mxu0 0.0
        %1720 = vmatprep.subr.mxu0 0.0
        %1721 = vmatpush1.msra.mxu0 0.0
        %1722 = vmatprep.subr.mxu0 0.0
        %1723 = vmatpush1.msra.mxu0 0.0
        %1724 = vmatprep.subr.mxu0 0.0
        %1725 = vmatpush1.msra.mxu0 0.0
        %1726 = vmatprep.subr.mxu0 0.0
        %1727 = vmatpush1.msra.mxu0 0.0
        %1728 = vmatprep.subr.mxu0 0.0
        %1729 = vmatpush1.msra.mxu0 0.0
        %1730 = vmatprep.subr.mxu0 0.0
        %1731 = vmatpush1.msra.mxu0 0.0
        %1732 = vmatprep.subr.mxu0 0.0
        %1733 = vmatpush1.msra.mxu0 0.0
        %1734 = vmatprep.subr.mxu0 0.0
        %1735 = vmatpush1.msra.mxu0 0.0
        %1736 = vmatprep.subr.mxu0 0.0
        %1737 = vmatpush1.msra.mxu0 0.0
        %1738 = vmatprep.subr.mxu0 0.0
        %1739 = vmatpush1.msra.mxu0 0.0
        %1740 = vmatprep.subr.mxu0 0.0
        %1741 = vmatpush1.msra.mxu0 0.0
        %1742 = vmatprep.subr.mxu0 0.0
        %1743 = vmatpush1.msra.mxu0 0.0
        %1744 = vmatprep.subr.mxu0 0.0
        %1745 = vmatpush1.msra.mxu0 0.0
        %1746 = vmatprep.subr.mxu0 0.0
        %1747 = vmatpush1.msra.mxu0 0.0
        %1748 = vmatprep.subr.mxu0 0.0
        %1749 = vmatpush1.msra.mxu0 0.0
        %1750 = vmatprep.mubr.f32.mxu0 0.0
        %1751 = vmatmul.mubr.f32.gmra.mrb[0].mxu0 %v1684
        %v1752 = vpop.f32.mrb[0].mxu0
        %v1753 = vadd.f32 0.0, %v1752
        %v1754 = vpop.f32.mrb[0].mxu0
        %1755 = vdwg.mxu0
        %v1756 = vpack.c.bf16 %v1753, %v1753
        %s1757 = scalar_lea.vmem %s904, 8
        %v1758 = vld [vmem:[%s1757] sm:$0xf]
        %v1760 = vsel %vm1166, %v1756, 0
        %v1763 = vsel %vm1501, %v1758, 0
        %1765 = vmatprep.subr.bf16.mxu0 0
        %1766 = vmatpush1.bf16.msra.mxu0 %v1763
        %1767 = vmatprep.subr.bf16.mxu0 0
        %1768 = vmatpush1.bf16.msra.mxu0 0
        %1769 = vmatprep.subr.bf16.mxu0 0
        %1770 = vmatpush1.bf16.msra.mxu0 0
        %1771 = vmatprep.subr.bf16.mxu0 0
        %1772 = vmatpush1.bf16.msra.mxu0 0
        %1773 = vmatprep.subr.bf16.mxu0 0
        %1774 = vmatpush1.bf16.msra.mxu0 0
        %1775 = vmatprep.subr.bf16.mxu0 0
        %1776 = vmatpush1.bf16.msra.mxu0 0
        %1777 = vmatprep.subr.bf16.mxu0 0
        %1778 = vmatpush1.bf16.msra.mxu0 0
        %1779 = vmatprep.subr.bf16.mxu0 0
        %1780 = vmatpush1.bf16.msra.mxu0 0
        %1781 = vmatprep.subr.bf16.mxu0 0
        %1782 = vmatpush1.bf16.msra.mxu0 0
        %1783 = vmatprep.subr.bf16.mxu0 0
        %1784 = vmatpush1.bf16.msra.mxu0 0
        %1785 = vmatprep.subr.bf16.mxu0 0
        %1786 = vmatpush1.bf16.msra.mxu0 0
        %1787 = vmatprep.subr.bf16.mxu0 0
        %1788 = vmatpush1.bf16.msra.mxu0 0
        %1789 = vmatprep.subr.bf16.mxu0 0
        %1790 = vmatpush1.bf16.msra.mxu0 0
        %1791 = vmatprep.subr.bf16.mxu0 0
        %1792 = vmatpush1.bf16.msra.mxu0 0
        %1793 = vmatprep.subr.bf16.mxu0 0
        %1794 = vmatpush1.bf16.msra.mxu0 0
        %1795 = vmatprep.subr.bf16.mxu0 0
        %1796 = vmatpush1.bf16.msra.mxu0 0
        %1797 = vmatprep.mubr.bf16.mxu0 0
        %1798 = vmatmul.mubr.bf16.gmra.mrb[0].mxu0 %v1760
        %v1799 = vpop.f32.mrb[0].mxu0
        %v1800 = vadd.f32 0.0, %v1799
        %v1801 = vpop.f32.mrb[0].mxu0
        %v1802 = vpop.f32.mrb[0].mxu0
        %v1803 = vpop.f32.mrb[0].mxu0
        %1804 = vdwg.mxu0
        %v1805 = vadd.f32 %v1586, %v1800
        %1806 = vrot.lane.b32.xlu0 %v1035, 104
        %v1807 = vpop.permute.xlu0 %1806
        %1808 = vrot.lane.b32.xlu0 %v1098, 104
        %v1809 = vpop.permute.xlu0 %1808
        %v1810 = vsel %vm1166, %v1807, 0
        %v1812 = vsel %vm1166, %v1809, 0
        %1814 = vmatprep.subr.mxu0 0.0
        %1815 = vmatpush1.xpose.msra.mxu0 %v1812
        %1816 = vmatprep.subr.mxu0 0.0
        %1817 = vmatpush1.xpose.msra.mxu0 0.0
        %1818 = vmatprep.subr.mxu0 0.0
        %1819 = vmatpush1.xpose.msra.mxu0 0.0
        %1820 = vmatprep.subr.mxu0 0.0
        %1821 = vmatpush1.xpose.msra.mxu0 0.0
        %1822 = vmatprep.subr.mxu0 0.0
        %1823 = vmatpush1.xpose.msra.mxu0 0.0
        %1824 = vmatprep.subr.mxu0 0.0
        %1825 = vmatpush1.xpose.msra.mxu0 0.0
        %1826 = vmatprep.subr.mxu0 0.0
        %1827 = vmatpush1.xpose.msra.mxu0 0.0
        %1828 = vmatprep.subr.mxu0 0.0
        %1829 = vmatpush1.xpose.msra.mxu0 0.0
        %1830 = vmatprep.subr.mxu0 0.0
        %1831 = vmatpush1.xpose.msra.mxu0 0.0
        %1832 = vmatprep.subr.mxu0 0.0
        %1833 = vmatpush1.xpose.msra.mxu0 0.0
        %1834 = vmatprep.subr.mxu0 0.0
        %1835 = vmatpush1.xpose.msra.mxu0 0.0
        %1836 = vmatprep.subr.mxu0 0.0
        %1837 = vmatpush1.xpose.msra.mxu0 0.0
        %1838 = vmatprep.subr.mxu0 0.0
        %1839 = vmatpush1.xpose.msra.mxu0 0.0
        %1840 = vmatprep.subr.mxu0 0.0
        %1841 = vmatpush1.xpose.msra.mxu0 0.0
        %1842 = vmatprep.subr.mxu0 0.0
        %1843 = vmatpush1.xpose.msra.mxu0 0.0
        %1844 = vmatprep.subr.mxu0 0.0
        %1845 = vmatpush1.xpose.msra.mxu0 0.0
        %1846 = vmatprep.subr.mxu0 0.0
        %1847 = vmatpush1.xpose.msra.mxu0 0.0
        %1848 = vmatprep.subr.mxu0 0.0
        %1849 = vmatpush1.xpose.msra.mxu0 0.0
        %1850 = vmatprep.subr.mxu0 0.0
        %1851 = vmatpush1.xpose.msra.mxu0 0.0
        %1852 = vmatprep.subr.mxu0 0.0
        %1853 = vmatpush1.xpose.msra.mxu0 0.0
        %1854 = vmatprep.subr.mxu0 0.0
        %1855 = vmatpush1.xpose.msra.mxu0 0.0
        %1856 = vmatprep.subr.mxu0 0.0
        %1857 = vmatpush1.xpose.msra.mxu0 0.0
        %1858 = vmatprep.subr.mxu0 0.0
        %1859 = vmatpush1.xpose.msra.mxu0 0.0
        %1860 = vmatprep.subr.mxu0 0.0
        %1861 = vmatpush1.xpose.msra.mxu0 0.0
        %1862 = vmatprep.subr.mxu0 0.0
        %1863 = vmatpush1.xpose.msra.mxu0 0.0
        %1864 = vmatprep.subr.mxu0 0.0
        %1865 = vmatpush1.xpose.msra.mxu0 0.0
        %1866 = vmatprep.subr.mxu0 0.0
        %1867 = vmatpush1.xpose.msra.mxu0 0.0
        %1868 = vmatprep.subr.mxu0 0.0
        %1869 = vmatpush1.xpose.msra.mxu0 0.0
        %1870 = vmatprep.subr.mxu0 0.0
        %1871 = vmatpush1.xpose.msra.mxu0 0.0
        %1872 = vmatprep.subr.mxu0 0.0
        %1873 = vmatpush1.xpose.msra.mxu0 0.0
        %1874 = vmatprep.subr.mxu0 0.0
        %1875 = vmatpush1.xpose.msra.mxu0 0.0
        %1876 = vmatprep.subr.mxu0 0.0
        %1877 = vmatpush1.xpose.msra.mxu0 0.0
        %1878 = vmatprep.mubr.f32.mxu0 0.0
        %1879 = vmatmul.mubr.f32.gmra.mrb[0].mxu0 %v1810
        %v1880 = vpop.f32.mrb[0].mxu0
        %v1881 = vadd.f32 0.0, %v1880
        %v1882 = vpop.f32.mrb[0].mxu0
        %1883 = vdwg.mxu0
        %v1884 = vsel %vm1166, %v1881, -inf
        %1885 = vmax.xlane.f32.xlu0 %v1884
        %v1886 = vpop.xlane.xlu0 %1885
        %v1887 = vsub.f32 %v1881, %v1886
        %v1888 = vmul.f32 %v1887, 1.442695
        %v1889 = vpow.pop %v1888
        %v1890 = vsel %vm1166, %v1889, 0.0
        %1891 = vadd.xlane.f32.xlu0 %v1890
        %v1892 = vpop.xlane.xlu0 %1891
        %v1893 = vrcp.pop %v1892
        %v1894 = vmul.f32 %v1889, %v1893
        %1895 = vrot.lane.b32.xlu0 %v1161, 104
        %v1896 = vpop.permute.xlu0 %1895
        %v1899 = vsel %vm1166, %v1894, 0
        %1901 = vmatprep.subr.mxu0 0.0
        %1902 = vmatpush1.msra.mxu0 %v1896
        %1903 = vmatprep.subr.mxu0 0.0
        %1904 = vmatpush1.msra.mxu0 0.0
        %1905 = vmatprep.subr.mxu0 0.0
        %1906 = vmatpush1.msra.mxu0 0.0
        %1907 = vmatprep.subr.mxu0 0.0
        %1908 = vmatpush1.msra.mxu0 0.0
        %1909 = vmatprep.subr.mxu0 0.0
        %1910 = vmatpush1.msra.mxu0 0.0
        %1911 = vmatprep.subr.mxu0 0.0
        %1912 = vmatpush1.msra.mxu0 0.0
        %1913 = vmatprep.subr.mxu0 0.0
        %1914 = vmatpush1.msra.mxu0 0.0
        %1915 = vmatprep.subr.mxu0 0.0
        %1916 = vmatpush1.msra.mxu0 0.0
        %1917 = vmatprep.subr.mxu0 0.0
        %1918 = vmatpush1.msra.mxu0 0.0
        %1919 = vmatprep.subr.mxu0 0.0
        %1920 = vmatpush1.msra.mxu0 0.0
        %1921 = vmatprep.subr.mxu0 0.0
        %1922 = vmatpush1.msra.mxu0 0.0
        %1923 = vmatprep.subr.mxu0 0.0
        %1924 = vmatpush1.msra.mxu0 0.0
        %1925 = vmatprep.subr.mxu0 0.0
        %1926 = vmatpush1.msra.mxu0 0.0
        %1927 = vmatprep.subr.mxu0 0.0
        %1928 = vmatpush1.msra.mxu0 0.0
        %1929 = vmatprep.subr.mxu0 0.0
        %1930 = vmatpush1.msra.mxu0 0.0
        %1931 = vmatprep.subr.mxu0 0.0
        %1932 = vmatpush1.msra.mxu0 0.0
        %1933 = vmatprep.subr.mxu0 0.0
        %1934 = vmatpush1.msra.mxu0 0.0
        %1935 = vmatprep.subr.mxu0 0.0
        %1936 = vmatpush1.msra.mxu0 0.0
        %1937 = vmatprep.subr.mxu0 0.0
        %1938 = vmatpush1.msra.mxu0 0.0
        %1939 = vmatprep.subr.mxu0 0.0
        %1940 = vmatpush1.msra.mxu0 0.0
        %1941 = vmatprep.subr.mxu0 0.0
        %1942 = vmatpush1.msra.mxu0 0.0
        %1943 = vmatprep.subr.mxu0 0.0
        %1944 = vmatpush1.msra.mxu0 0.0
        %1945 = vmatprep.subr.mxu0 0.0
        %1946 = vmatpush1.msra.mxu0 0.0
        %1947 = vmatprep.subr.mxu0 0.0
        %1948 = vmatpush1.msra.mxu0 0.0
        %1949 = vmatprep.subr.mxu0 0.0
        %1950 = vmatpush1.msra.mxu0 0.0
        %1951 = vmatprep.subr.mxu0 0.0
        %1952 = vmatpush1.msra.mxu0 0.0
        %1953 = vmatprep.subr.mxu0 0.0
        %1954 = vmatpush1.msra.mxu0 0.0
        %1955 = vmatprep.subr.mxu0 0.0
        %1956 = vmatpush1.msra.mxu0 0.0
        %1957 = vmatprep.subr.mxu0 0.0
        %1958 = vmatpush1.msra.mxu0 0.0
        %1959 = vmatprep.subr.mxu0 0.0
        %1960 = vmatpush1.msra.mxu0 0.0
        %1961 = vmatprep.subr.mxu0 0.0
        %1962 = vmatpush1.msra.mxu0 0.0
        %1963 = vmatprep.subr.mxu0 0.0
        %1964 = vmatpush1.msra.mxu0 0.0
        %1965 = vmatprep.mubr.f32.mxu0 0.0
        %1966 = vmatmul.mubr.f32.gmra.mrb[0].mxu0 %v1899
        %v1967 = vpop.f32.mrb[0].mxu0
        %v1968 = vadd.f32 0.0, %v1967
        %v1969 = vpop.f32.mrb[0].mxu0
        %1970 = vdwg.mxu0
        %v1971 = vpack.c.bf16 %v1968, %v1968
        %s1972 = scalar_lea.vmem %s904, 12
        %v1973 = vld [vmem:[%s1972] sm:$0xf]
        %v1975 = vsel %vm1166, %v1971, 0
        %v1978 = vsel %vm1501, %v1973, 0
        %1980 = vmatprep.subr.bf16.mxu0 0
        %1981 = vmatpush1.bf16.msra.mxu0 %v1978
        %1982 = vmatprep.subr.bf16.mxu0 0
        %1983 = vmatpush1.bf16.msra.mxu0 0
        %1984 = vmatprep.subr.bf16.mxu0 0
        %1985 = vmatpush1.bf16.msra.mxu0 0
        %1986 = vmatprep.subr.bf16.mxu0 0
        %1987 = vmatpush1.bf16.msra.mxu0 0
        %1988 = vmatprep.subr.bf16.mxu0 0
        %1989 = vmatpush1.bf16.msra.mxu0 0
        %1990 = vmatprep.subr.bf16.mxu0 0
        %1991 = vmatpush1.bf16.msra.mxu0 0
        %1992 = vmatprep.subr.bf16.mxu0 0
        %1993 = vmatpush1.bf16.msra.mxu0 0
        %1994 = vmatprep.subr.bf16.mxu0 0
        %1995 = vmatpush1.bf16.msra.mxu0 0
        %1996 = vmatprep.subr.bf16.mxu0 0
        %1997 = vmatpush1.bf16.msra.mxu0 0
        %1998 = vmatprep.subr.bf16.mxu0 0
        %1999 = vmatpush1.bf16.msra.mxu0 0
        %2000 = vmatprep.subr.bf16.mxu0 0
        %2001 = vmatpush1.bf16.msra.mxu0 0
        %2002 = vmatprep.subr.bf16.mxu0 0
        %2003 = vmatpush1.bf16.msra.mxu0 0
        %2004 = vmatprep.subr.bf16.mxu0 0
        %2005 = vmatpush1.bf16.msra.mxu0 0
        %2006 = vmatprep.subr.bf16.mxu0 0
        %2007 = vmatpush1.bf16.msra.mxu0 0
        %2008 = vmatprep.subr.bf16.mxu0 0
        %2009 = vmatpush1.bf16.msra.mxu0 0
        %2010 = vmatprep.subr.bf16.mxu0 0
        %2011 = vmatpush1.bf16.msra.mxu0 0
        %2012 = vmatprep.mubr.bf16.mxu0 0
        %2013 = vmatmul.mubr.bf16.gmra.mrb[0].mxu0 %v1975
        %v2014 = vpop.f32.mrb[0].mxu0
        %v2015 = vadd.f32 0.0, %v2014
        %v2016 = vpop.f32.mrb[0].mxu0
        %v2017 = vpop.f32.mrb[0].mxu0
        %v2018 = vpop.f32.mrb[0].mxu0
        %2019 = vdwg.mxu0
        %v2020 = vadd.f32 %v1805, %v2015
        %v2021 = vld [vmem:[%s907] sm:$0x1]
        %v2023 = vlaneseq
        %v2024 = vshrl.u32 %v2023, 7
        %v2025 = vsub.s32 0, %v2024
        %v2026 = vrot.slane %v2021, %v2025
        %v2028 = vadd.f32 %v2020, %v2026
        %v2029 = vadd.f32 %v941, %v2028
        %v2030 = vld [vmem:[%s910] sm:$0x1]
        %v2031 = vld [vmem:[%s913] sm:$0x1]
        %v2032 = vsel %vm944, %v2029, 0.0
        %2033 = vadd.xlane.f32.xlu0 %v2032
        %v2034 = vpop.xlane.xlu0 %2033
        %v2035 = vmul.f32 %v2034, %v948
        %v2036 = vsub.f32 %v2029, %v2035
        %v2037 = vmul.f32 %v2036, %v2036
        %v2038 = vsel %vm944, %v2037, 0.0
        %2039 = vadd.xlane.f32.xlu0 %v2038
        %v2040 = vpop.xlane.xlu0 %2039
        %v2041 = vmul.f32 %v2040, %v948
        %v2042 = vadd.f32 %v2041, 1e-05
        %v2043 = vrsqrt.pop %v2042
        %v2044 = vmul.f32 %v2036, %v2043
        %v2046 = vlaneseq
        %v2047 = vshrl.u32 %v2046, 7
        %v2048 = vsub.s32 0, %v2047
        %v2049 = vrot.slane %v2030, %v2048
        %v2051 = vmul.f32 %v2044, %v2049
        %v2053 = vlaneseq
        %v2054 = vshrl.u32 %v2053, 7
        %v2055 = vsub.s32 0, %v2054
        %v2056 = vrot.slane %v2031, %v2055
        %v2058 = vadd.f32 %v2051, %v2056
        %v2059 = vpack.c.bf16 %v2058, %v2058
        %v2060 = vld [vmem:[%s918] sm:$0xf]
        %v2061 = vld [vmem:[%s918 + $0x4] sm:$0xf]
        %v2062 = vld [vmem:[%s918 + $0x8] sm:$0xf]
        %v2063 = vld [vmem:[%s918 + $0xc] sm:$0xf]
        %v2064 = vld [vmem:[%s921] sm:$0x1]
        %v2066 = vlaneseq
        %v2067 = vshrl.u32 %v2066, 7
        %v2068 = vsub.s32 0, %v2067
        %v2069 = vrot.slane %v2064, %v2068
        %v2075 = vunpack.c.l.b16 %v2060
        %v2076 = vunpack.c.l.b16 %v2061
        %v2077 = vunpack.c.l.b16 %v2062
        %v2078 = vunpack.c.l.b16 %v2063
        %v2079 = vpack.c.b16 %v2076, %v2075
        %v2080 = vpack.c.b16 %v2078, %v2077
        %v2084 = vsel %vm944, %v2059, 0
        %2086 = vmatprep.subr.bf16.mxu0 0
        %2087 = vmatpush1.bf16.msra.mxu0 %v2079
        %2088 = vmatprep.subr.bf16.mxu0 0
        %2089 = vmatpush1.bf16.msra.mxu0 %v2080
        %2090 = vmatprep.subr.bf16.mxu0 0
        %2091 = vmatpush1.bf16.msra.mxu0 0
        %2092 = vmatprep.subr.bf16.mxu0 0
        %2093 = vmatpush1.bf16.msra.mxu0 0
        %2094 = vmatprep.subr.bf16.mxu0 0
        %2095 = vmatpush1.bf16.msra.mxu0 0
        %2096 = vmatprep.subr.bf16.mxu0 0
        %2097 = vmatpush1.bf16.msra.mxu0 0
        %2098 = vmatprep.subr.bf16.mxu0 0
        %2099 = vmatpush1.bf16.msra.mxu0 0
        %2100 = vmatprep.subr.bf16.mxu0 0
        %2101 = vmatpush1.bf16.msra.mxu0 0
        %2102 = vmatprep.subr.bf16.mxu0 0
        %2103 = vmatpush1.bf16.msra.mxu0 0
        %2104 = vmatprep.subr.bf16.mxu0 0
        %2105 = vmatpush1.bf16.msra.mxu0 0
        %2106 = vmatprep.subr.bf16.mxu0 0
        %2107 = vmatpush1.bf16.msra.mxu0 0
        %2108 = vmatprep.subr.bf16.mxu0 0
        %2109 = vmatpush1.bf16.msra.mxu0 0
        %2110 = vmatprep.subr.bf16.mxu0 0
        %2111 = vmatpush1.bf16.msra.mxu0 0
        %2112 = vmatprep.subr.bf16.mxu0 0
        %2113 = vmatpush1.bf16.msra.mxu0 0
        %2114 = vmatprep.subr.bf16.mxu0 0
        %2115 = vmatpush1.bf16.msra.mxu0 0
        %2116 = vmatprep.subr.bf16.mxu0 0
        %2117 = vmatpush1.bf16.msra.mxu0 0
        %2118 = vmatprep.mubr.bf16.mxu0 0
        %2119 = vmatmul.mubr.bf16.gmra.mrb[0].mxu0 %v2084
        %v2120 = vpop.f32.mrb[0].mxu0
        %v2121 = vadd.f32 %v2069, %v2120
        %v2122 = vpop.f32.mrb[0].mxu0
        %v2123 = vpop.f32.mrb[0].mxu0
        %v2124 = vpop.f32.mrb[0].mxu0
        %2125 = vdwg.mxu0
        %v2126 = vmul.f32 %v2121, %v2121
        %v2127 = vmul.f32 %v2121, %v2126
        %v2128 = vmul.f32 %v2127, 0.044715
        %v2129 = vadd.f32 %v2121, %v2128
        %v2130 = vmul.f32 %v2129, 0.7978846
        %v2131 = vtanh.pop %v2130
        %v2132 = vadd.f32 %v2131, 1.0
        %v2133 = vmul.f32 %v2132, 0.5
        %v2134 = vmul.f32 %v2121, %v2133
        %v2135 = vpack.c.bf16 %v2134, %v2134
        %v2136 = vld [vmem:[%s926] sm:$0xf]
        %v2137 = vld [vmem:[%s926 + $0x4] sm:$0xf]
        %v2138 = vld [vmem:[%s926 + $0x8] sm:$0xf]
        %v2139 = vld [vmem:[%s926 + $0xc] sm:$0xf]
        %v2140 = vld [vmem:[%s926 + $0x10] sm:$0xf]
        %v2141 = vld [vmem:[%s926 + $0x14] sm:$0xf]
        %v2142 = vld [vmem:[%s926 + $0x18] sm:$0xf]
        %v2143 = vld [vmem:[%s926 + $0x1c] sm:$0xf]
        %v2144 = vld [vmem:[%s926 + $0x20] sm:$0xf]
        %v2145 = vld [vmem:[%s926 + $0x24] sm:$0xf]
        %v2146 = vld [vmem:[%s926 + $0x28] sm:$0xf]
        %v2147 = vld [vmem:[%s926 + $0x2c] sm:$0xf]
        %v2148 = vld [vmem:[%s926 + $0x30] sm:$0xf]
        %v2149 = vld [vmem:[%s926 + $0x34] sm:$0xf]
        %v2150 = vld [vmem:[%s926 + $0x38] sm:$0xf]
        %v2151 = vld [vmem:[%s926 + $0x3c] sm:$0xf]
        %v2152 = vld [vmem:[%s929] sm:$0x1]
        %v2154 = vlaneseq
        %v2155 = vshrl.u32 %v2154, 7
        %v2156 = vsub.s32 0, %v2155
        %v2157 = vrot.slane %v2152, %v2156
        %v2175 = vunpack.c.l.b16 %v2136
        %v2176 = vunpack.c.l.b16 %v2137
        %v2177 = vunpack.c.l.b16 %v2138
        %v2178 = vunpack.c.l.b16 %v2139
        %v2179 = vunpack.c.l.b16 %v2140
        %v2180 = vunpack.c.l.b16 %v2141
        %v2181 = vunpack.c.l.b16 %v2142
        %v2182 = vunpack.c.l.b16 %v2143
        %v2183 = vunpack.c.l.b16 %v2144
        %v2184 = vunpack.c.l.b16 %v2145
        %v2185 = vunpack.c.l.b16 %v2146
        %v2186 = vunpack.c.l.b16 %v2147
        %v2187 = vunpack.c.l.b16 %v2148
        %v2188 = vunpack.c.l.b16 %v2149
        %v2189 = vunpack.c.l.b16 %v2150
        %v2190 = vunpack.c.l.b16 %v2151
        %v2191 = vpack.c.b16 %v2176, %v2175
        %v2192 = vpack.c.b16 %v2178, %v2177
        %v2193 = vpack.c.b16 %v2180, %v2179
        %v2194 = vpack.c.b16 %v2182, %v2181
        %v2195 = vpack.c.b16 %v2184, %v2183
        %v2196 = vpack.c.b16 %v2186, %v2185
        %v2197 = vpack.c.b16 %v2188, %v2187
        %v2198 = vpack.c.b16 %v2190, %v2189
        %2207 = vmatprep.subr.bf16.mxu0 0
        %2208 = vmatpush1.bf16.msra.mxu0 %v2191
        %2209 = vmatprep.subr.bf16.mxu0 0
        %2210 = vmatpush1.bf16.msra.mxu0 %v2192
        %2211 = vmatprep.subr.bf16.mxu0 0
        %2212 = vmatpush1.bf16.msra.mxu0 %v2193
        %2213 = vmatprep.subr.bf16.mxu0 0
        %2214 = vmatpush1.bf16.msra.mxu0 %v2194
        %2215 = vmatprep.subr.bf16.mxu0 0
        %2216 = vmatpush1.bf16.msra.mxu0 %v2195
        %2217 = vmatprep.subr.bf16.mxu0 0
        %2218 = vmatpush1.bf16.msra.mxu0 %v2196
        %2219 = vmatprep.subr.bf16.mxu0 0
        %2220 = vmatpush1.bf16.msra.mxu0 %v2197
        %2221 = vmatprep.subr.bf16.mxu0 0
        %2222 = vmatpush1.bf16.msra.mxu0 %v2198
        %2223 = vmatprep.subr.bf16.mxu0 0
        %2224 = vmatpush1.bf16.msra.mxu0 0
        %2225 = vmatprep.subr.bf16.mxu0 0
        %2226 = vmatpush1.bf16.msra.mxu0 0
        %2227 = vmatprep.subr.bf16.mxu0 0
        %2228 = vmatpush1.bf16.msra.mxu0 0
        %2229 = vmatprep.subr.bf16.mxu0 0
        %2230 = vmatpush1.bf16.msra.mxu0 0
        %2231 = vmatprep.subr.bf16.mxu0 0
        %2232 = vmatpush1.bf16.msra.mxu0 0
        %2233 = vmatprep.subr.bf16.mxu0 0
        %2234 = vmatpush1.bf16.msra.mxu0 0
        %2235 = vmatprep.subr.bf16.mxu0 0
        %2236 = vmatpush1.bf16.msra.mxu0 0
        %2237 = vmatprep.subr.bf16.mxu0 0
        %2238 = vmatpush1.bf16.msra.mxu0 0
        %2239 = vmatprep.mubr.bf16.mxu0 0
        %2240 = vmatmul.mubr.bf16.gmra.mrb[0].mxu0 %v2135
        %v2241 = vpop.f32.mrb[0].mxu0
        %v2242 = vadd.f32 %v2157, %v2241
        %v2243 = vpop.f32.mrb[0].mxu0
        %v2244 = vpop.f32.mrb[0].mxu0
        %v2245 = vpop.f32.mrb[0].mxu0
        %2246 = vdwg.mxu0
        %v2247 = vadd.f32 %v2029, %v2242
        %2248 = vst.msk [vmem:[%s869] sm:$0xff] %vm944, %v2247
        %p2249 = scmp.eq.s32.totalorder %s43, 1
        // Predicated region
        $region113: #{tpu_custom_call.1} parent=99 // pred_check
          %p2250 = pneg %p2249
        $region114: #{tpu_custom_call.1} parent=99 // pred_check_branch
          %2252 = sbr.rel (%p2250) target = $region116
        $region115: #{tpu_custom_call.1} parent=99 // pred_region
          %v2253 = vld [vmem:[%s18] sm:$0x1]
          %v2254 = vld [vmem:[%s19] sm:$0x1]
          %v2255 = vsel %vm944, %v2247, 0.0
          %2256 = vadd.xlane.f32.xlu0 %v2255
          %v2257 = vpop.xlane.xlu0 %2256
          %v2258 = vmul.f32 %v2257, %v948
          %v2259 = vsub.f32 %v2247, %v2258
          %v2260 = vmul.f32 %v2259, %v2259
          %v2261 = vsel %vm944, %v2260, 0.0
          %2262 = vadd.xlane.f32.xlu0 %v2261
          %v2263 = vpop.xlane.xlu0 %2262
          %v2264 = vmul.f32 %v2263, %v948
          %v2265 = vadd.f32 %v2264, 1e-05
          %v2266 = vrsqrt.pop %v2265
          %v2267 = vmul.f32 %v2259, %v2266
          %v2269 = vlaneseq
          %v2270 = vshrl.u32 %v2269, 7
          %v2271 = vsub.s32 0, %v2270
          %v2272 = vrot.slane %v2253, %v2271
          %v2274 = vmul.f32 %v2267, %v2272
          %v2276 = vlaneseq
          %v2277 = vshrl.u32 %v2276, 7
          %v2278 = vsub.s32 0, %v2277
          %v2279 = vrot.slane %v2254, %v2278
          %v2281 = vadd.f32 %v2274, %v2279
          %2282 = vst.msk [vmem:[%s869] sm:$0xff] %vm944, %v2281
        $region116: #{tpu_custom_call.1} parent=99 // pred_fallthru
          _
        %s2283 = sand.u32 %s563, 1
        %s2284 = scalar_lea.sflag [#allocation4], %s2283
        %s2285 = sand.u32 %s563, 1
        %s2286 = smul.addr %s2285, 8
        %s2287 = scalar_lea.vmem [#allocation7], %s2286
        // Predicated region
        $region117: #{tpu_custom_call.1} parent=99 // pred_check
          %p2288 = pneg %p573
        $region118: #{tpu_custom_call.1} parent=99 // pred_check_branch
          %2290 = sbr.rel (%p2288) target = $region120
        $region119: #{tpu_custom_call.1} parent=99 // pred_region
          %s2292 = ssub.s32 128, 128
          %2293 = vsyncadd %s2284, %s2292
          %s2294 = smul.addr %s42, 128
          %s2295 = scalar_lea.hbm %s20, %s2294
          %s2297 = sshll.u32 %s2287, 4
          %s2298 = int_to_ptr.vmem [resolvable:$true] %s2297
          %2300 = dma.vmem_to_hbm [thread:$0]  %s2298, 128, %s2295, %s2284
        $region120: #{tpu_custom_call.1} parent=99 // pred_fallthru
          _
      $region100: #{tpu_custom_call.1} parent=5 // pred_fallthru
        _
      %p2301 = scmp.le.s32.totalorder 2, %s33
      // Predicated region
      $region121: #{tpu_custom_call.1} parent=5 // pred_check
        %p2302 = pneg %p2301
      $region122: #{tpu_custom_call.1} parent=5 // pred_check_branch
        %2304 = sbr.rel (%p2302) target = $region124
      $region123: #{tpu_custom_call.1} parent=5 // pred_region
        %s2305 = ssub.s32 %s33, 2
        // Predicated region
        $region125: #{tpu_custom_call.1} parent=123 // pred_check
          %p2306 = pneg %p579
        $region126: #{tpu_custom_call.1} parent=123 // pred_check_branch
          %2308 = sbr.rel (%p2306) target = $region128
        $region127: #{tpu_custom_call.1} parent=123 // pred_region
          %s2309 = sand.u32 %s564, 1
          %s2310 = scalar_lea.sflag [#allocation4], %s2309
          %s2311 = sand.u32 %s564, 1
          %s2312 = smul.addr %s2311, 8
          %s2313 = scalar_lea.vmem [#allocation7], %s2312
          %2314 = dma.done %s2310, 128
        $region128: #{tpu_custom_call.1} parent=123 // pred_fallthru
          _
      $region124: #{tpu_custom_call.1} parent=5 // pred_fallthru
        _
    $region6: #{tpu_custom_call.1} parent=1 // loop_footer
      %s37 = sadd.s32 1, %s33
    $region7: #{tpu_custom_call.1} parent=1 // loop_footer_branch
      %32 = sbr.rel target = $region3
    $region8: #{tpu_custom_call.1} parent=1 // loop_exit
      _
    %2315 = vsyncpa [#allocation3], 1
    %s2316 = scalar_lea.sflag [#allocation3], 1
    %2317 = vsyncpa %s2316, 1
    %2318 = vsyncpa [#allocation6], 1
    %2319 = vsyncpa [#allocation4], 1
    %s2320 = scalar_lea.sflag [#allocation4], 1
    %2321 = vsyncpa %s2320, 1

</llo_original>
